<compile_context>
chip_gen: v5e
topology: v5e:2x2
jax: 0.10.0
libtpu: 0.0.40
codegen_flags: <defaults>
</compile_context>

<pallas_src>
import functools

import jax
import jax.numpy as jnp
from jax import lax
from jax.experimental import pallas as pl
from jax.experimental.pallas import tpu as pltpu

BN_EPS = 1e-5      # nn.BatchNorm1d default eps
NORM_EPS = 1e-12   # F.normalize default eps


def _vmem_limit_bytes():
    # ~85% of physical VMEM: v5e/v6e (128 MiB) -> ~108 MiB, v7x (64 MiB) -> ~54 MiB.
    try:
        cap = pltpu.get_tpu_info().vmem_capacity_bytes
        return int(cap * 0.85)
    except Exception:
        return 56 * 1024 * 1024


_VMEM_LIMIT = _vmem_limit_bytes()


# ------------------------------ helpers ------------------------------------

def _round_up(x, m):
    return ((x + m - 1) // m) * m


def _full_spec(shape):
    return pl.BlockSpec(shape, lambda: (0,) * len(shape))


def _pick_row_tile(n, cap=256):
    if n <= cap:
        return n                       # full dim is always a legal block
    for t in (256, 128, 64, 32, 16, 8):
        if t <= cap and n % t == 0:
            return t
    return n  # TODO(synk): non-divisible large batches fall back to one row tile


def _pick_col_tile(d, cap=1024):
    # d is a multiple of 128 (wrapper pads all feature dims).
    t = min(d, cap)
    while d % t:
        t -= 128
    return t


def _batchnorm_f32(x, gamma=None, beta=None, relu=False):
    """Training-mode BatchNorm1d (biased batch stats over axis 0), f32 math.

    Zero-padded feature columns stay exactly zero: mean=0, var=0 ->
    (0-0)*rsqrt(eps) = 0, and padded gamma/beta are 0.
    """
    mean = jnp.mean(x, axis=0, keepdims=True)
    var = jnp.mean(jnp.square(x - mean), axis=0, keepdims=True)
    y = (x - mean) * lax.rsqrt(var + BN_EPS)
    if gamma is not None:
        y = y * gamma + beta
    if relu:
        y = jnp.maximum(y, 0.0)
    return y


# ----------------------------- Pallas kernels ------------------------------

def _backbone_kernel(x_ref, w_ref, o_ref, acc_ref):
    # Tiled bias-free Linear + ReLU.  x tile arrives f32 straight from the
    # raw input (no XLA cast pass); cast to bf16 here for the MXU, f32 acc.
    @pl.when(pl.program_id(3) == 0)
    def _():
        acc_ref[...] = jnp.zeros_like(acc_ref)

    acc_ref[...] += jnp.dot(x_ref[...].astype(jnp.bfloat16), w_ref[...],
                            preferred_element_type=jnp.float32)

    @pl.when(pl.program_id(3) == pl.num_programs(3) - 1)
    def _():
        o_ref[...] = jnp.maximum(acc_ref[...], 0.0).astype(o_ref.dtype)


def _encoder_head_kernel(h_ref, w1_ref, g1_ref, b1_ref, w2_ref, o_ref, acc_ref):
    # encoder.fc = Linear -> BN -> ReLU -> Linear -> BN(affine=False), fused.
    # Grid: (view, mlp column tile).  BN1 stats are per-feature over rows, so
    # column tiling of the mlp axis is exact; z2 accumulates across tiles and
    # the final affine-free BN is applied once at the last tile.
    m = pl.program_id(1)

    @pl.when(m == 0)
    def _():
        acc_ref[...] = jnp.zeros_like(acc_ref)

    z1 = jnp.dot(h_ref[...], w1_ref[...], preferred_element_type=jnp.float32)
    y1 = _batchnorm_f32(z1, g1_ref[...], b1_ref[...], relu=True)
    acc_ref[...] += jnp.dot(y1.astype(jnp.bfloat16), w2_ref[...],
                            preferred_element_type=jnp.float32)

    @pl.when(m == pl.num_programs(1) - 1)
    def _():
        o_ref[...] = _batchnorm_f32(acc_ref[...])   # last BN: no affine, no ReLU


def _predictor_loss_kernel(q_ref, w1_ref, g1_ref, b1_ref, w2_ref, o_ref, *,
                           temperature):
    # predictor(q1_enc) + contrastive_loss(q1, q2) + contrastive_loss(q2, q1),
    # fused in one call (q1_enc/q2 never round-trip through HBM separately).
    q1_enc = q_ref[0]           # (N, Dpad) f32, encoder output of view 0
    q2 = q_ref[1]               # (N, Dpad) f32, encoder output of view 1

    z1 = jnp.dot(q1_enc.astype(jnp.bfloat16), w1_ref[...],
                 preferred_element_type=jnp.float32)
    y1 = _batchnorm_f32(z1, g1_ref[...], b1_ref[...], relu=True)
    q1 = jnp.dot(y1.astype(jnp.bfloat16), w2_ref[...],
                 preferred_element_type=jnp.float32)

    def _l2norm(q):
        # F.normalize: q / max(||q||, eps) == q * rsqrt(max(||q||^2, eps^2))
        ss = jnp.sum(q * q, axis=1, keepdims=True)
        return q * lax.rsqrt(jnp.maximum(ss, NORM_EPS * NORM_EPS))

    q1n = _l2norm(q1)
    q2n = _l2norm(q2)
    inv_t = 1.0 / temperature

    contract = (((1,), (1,)), ((), ()))   # 'nc,mc->nm'
    logits12 = lax.dot_general(q1n, q2n, contract,
                               preferred_element_type=jnp.float32) * inv_t
    # Second tiny matmul on the (idle) MXU instead of axis=0 XLU reductions.
    logits21 = lax.dot_general(q2n, q1n, contract,
                               preferred_element_type=jnp.float32) * inv_t

    n = q1.shape[0]
    row_ids = lax.broadcasted_iota(jnp.int32, (n, n), 0)
    col_ids = lax.broadcasted_iota(jnp.int32, (n, n), 1)
    eye = row_ids == col_ids

    def _ce_rows(lg):
        diag = jnp.sum(jnp.where(eye, lg, 0.0), axis=1, keepdims=True)
        mx = jnp.max(lg, axis=1, keepdims=True)
        lse = jnp.log(jnp.sum(jnp.exp(lg - mx), axis=1, keepdims=True)) + mx
        return jnp.mean(lse - diag)

    loss = (_ce_rows(logits12) + _ce_rows(logits21)) * (2.0 * temperature)
    o_ref[...] = jnp.reshape(loss, (1, 1))


# ------------------------------ wrappers -----------------------------------

def pallas_backbone(x2d, w_bf16, kpad):
    """x2d: (N, 2*kpad) f32 (view v occupies columns [v*kpad, (v+1)*kpad)).
    Returns (2, N, Hpad) bf16 = ReLU(x_v @ W) per view."""
    n = x2d.shape[0]
    dout = w_bf16.shape[1]
    tn = _pick_row_tile(n)
    tk = _pick_col_tile(kpad)
    tj = _pick_col_tile(dout)
    kb = kpad // tk
    grid = (2, n // tn, dout // tj, kb)
    return pl.pallas_call(
        _backbone_kernel,
        out_shape=jax.ShapeDtypeStruct((2, n, dout), jnp.bfloat16),
        grid_spec=pltpu.PrefetchScalarGridSpec(
            num_scalar_prefetch=0,
            grid=grid,
            in_specs=[
                # view offset folded into the column block index: v*kb + k
                pl.BlockSpec((tn, tk), lambda v, i, j, k: (i, v * kb + k)),
                pl.BlockSpec((tk, tj), lambda v, i, j, k: (k, j)),
            ],
            out_specs=pl.BlockSpec((None, tn, tj), lambda v, i, j, k: (v, i, j)),
            scratch_shapes=[pltpu.VMEM((tn, tj), jnp.float32)]),
        compiler_params=pltpu.CompilerParams(
            dimension_semantics=("parallel", "parallel", "parallel", "arbitrary"),
            vmem_limit_bytes=_VMEM_LIMIT),
    )(x2d, w_bf16)


def pallas_encoder_head(h_views, w1, g1, b1, w2):
    # h_views: (2, N, Hpad) bf16 -> (2, N, Dpad) f32.
    # Grid over (view, mlp column tile); BN batch stats stay per-view.
    nv, n, hp = h_views.shape
    mp = w1.shape[1]
    dp = w2.shape[1]
    tm = _pick_col_tile(mp)
    return pl.pallas_call(
        _encoder_head_kernel,
        out_shape=jax.ShapeDtypeStruct((nv, n, dp), jnp.float32),
        grid=(nv, mp // tm),
        in_specs=[pl.BlockSpec((None, n, hp), lambda v, m: (v, 0, 0)),
                  pl.BlockSpec((hp, tm), lambda v, m: (0, m)),
                  pl.BlockSpec((1, tm), lambda v, m: (0, m)),
                  pl.BlockSpec((1, tm), lambda v, m: (0, m)),
                  pl.BlockSpec((tm, dp), lambda v, m: (m, 0))],
        out_specs=pl.BlockSpec((None, n, dp), lambda v, m: (v, 0, 0)),
        scratch_shapes=[pltpu.VMEM((n, dp), jnp.float32)],
        compiler_params=pltpu.CompilerParams(
            dimension_semantics=("parallel", "arbitrary"),
            vmem_limit_bytes=_VMEM_LIMIT),
    )(h_views, w1, g1, b1, w2)


def pallas_predictor_loss(q_all, w1, g1, b1, w2, temperature):
    nv, n, dp = q_all.shape
    mp = w1.shape[1]
    out = pl.pallas_call(
        functools.partial(_predictor_loss_kernel, temperature=temperature),
        out_shape=jax.ShapeDtypeStruct((1, 1), jnp.float32),
        in_specs=[_full_spec((nv, n, dp)), _full_spec((dp, mp)),
                  _full_spec((1, mp)), _full_spec((1, mp)),
                  _full_spec((mp, dp))],
        out_specs=_full_spec((1, 1)),
        compiler_params=pltpu.CompilerParams(vmem_limit_bytes=_VMEM_LIMIT),
    )(q_all, w1, g1, b1, w2)
    return out[0, 0]


# ------------------------------- model -------------------------------------

def init_params(key, in_features, hidden_dim, mlp_dim, dim):
    ks = jax.random.split(key, 5)

    def w(k, dout, din):
        # torch Linear weight is (dout, din); stored transposed so kernels do x @ w.
        return jax.random.normal(k, (din, dout), jnp.float32) / jnp.sqrt(
            jnp.float32(din))

    return {
        # TODO(synk): base_encoder is an abstract constructor arg; its conv
        # trunk is replaced by a synthetic bias-free Linear + ReLU projection.
        "backbone_w": w(ks[0], hidden_dim, in_features),
        # encoder.fc = _build_mlp(2, hidden_dim, mlp_dim, dim, last_bn=True)
        "enc_fc1_w": w(ks[1], mlp_dim, hidden_dim),
        "enc_bn1_g": jnp.ones((mlp_dim,), jnp.float32),
        "enc_bn1_b": jnp.zeros((mlp_dim,), jnp.float32),
        "enc_fc2_w": w(ks[2], dim, mlp_dim),
        # predictor = _build_mlp(2, dim, mlp_dim, dim, last_bn=False)
        "pred_fc1_w": w(ks[3], mlp_dim, dim),
        "pred_bn1_g": jnp.ones((mlp_dim,), jnp.float32),
        "pred_bn1_b": jnp.zeros((mlp_dim,), jnp.float32),
        "pred_fc2_w": w(ks[4], dim, mlp_dim),
    }


def prepare_params(params, H, W, hidden_dim, mlp_dim, dim):
    """Done once, outside the step: fold the 3x channel tiling
    (torch.cat([x,x,x],1)) into the backbone weight, zero-pad every feature
    dim to a multiple of 128 (lane-dense outputs), cast matmul weights bf16."""
    hw = H * W
    kpad = _round_up(hw, 128)
    hid_p = _round_up(hidden_dim, 128)
    mlp_p = _round_up(mlp_dim, 128)
    dim_p = _round_up(dim, 128)

    def pad2(a, rows, cols):
        return jnp.pad(a, ((0, rows - a.shape[0]), (0, cols - a.shape[1])))

    def pad_row(v, cols):
        return jnp.pad(v.reshape(1, -1), ((0, 0), (0, cols - v.shape[0])))

    bw = params["backbone_w"]                               # (3*hw, hidden)
    bw_fold = bw[0:hw] + bw[hw:2 * hw] + bw[2 * hw:3 * hw]  # (hw, hidden)

    prepared = {
        "backbone_w": pad2(bw_fold, kpad, hid_p).astype(jnp.bfloat16),
        "enc_fc1_w": pad2(params["enc_fc1_w"], hid_p, mlp_p).astype(jnp.bfloat16),
        "enc_bn1_g": pad_row(params["enc_bn1_g"], mlp_p),
        "enc_bn1_b": pad_row(params["enc_bn1_b"], mlp_p),
        "enc_fc2_w": pad2(params["enc_fc2_w"], mlp_p, dim_p).astype(jnp.bfloat16),
        "pred_fc1_w": pad2(params["pred_fc1_w"], dim_p, mlp_p).astype(jnp.bfloat16),
        "pred_bn1_g": pad_row(params["pred_bn1_g"], mlp_p),
        "pred_bn1_b": pad_row(params["pred_bn1_b"], mlp_p),
        "pred_fc2_w": pad2(params["pred_fc2_w"], mlp_p, dim_p).astype(jnp.bfloat16),
    }
    return prepared, kpad


def siamese_forward(pp, batch, *, temperature, kpad, hw):
    # batch: (N, 2, H, W) f32 — two views stacked on the channel axis (NCHW).
    n = batch.shape[0]
    x3 = batch.reshape(n, 2, hw)                 # free reshape (contiguous)
    if kpad != hw:
        # Single XLA pass only when H*W isn't already a multiple of 128.
        x3 = jnp.pad(x3, ((0, 0), (0, 0), (0, kpad - hw)))
    x2d = x3.reshape(n, 2 * kpad)                # free reshape; no concat/cast

    h = pallas_backbone(x2d, pp["backbone_w"], kpad)              # (2, N, Hpad) bf16
    q_all = pallas_encoder_head(h, pp["enc_fc1_w"], pp["enc_bn1_g"],
                                pp["enc_bn1_b"], pp["enc_fc2_w"])  # (2, N, Dpad) f32
    # q1 = predictor(encoder(x1)), q2 = encoder(x2);
    # loss = contrastive_loss(q1, q2) + contrastive_loss(q2, q1).
    return pallas_predictor_loss(q_all, pp["pred_fc1_w"], pp["pred_bn1_g"],
                                 pp["pred_bn1_b"], pp["pred_fc2_w"], temperature)


# -------------------------------- main --------------------------------------

if __name__ == "__main__":
    N, H, W = 8, 16, 16
    HIDDEN_DIM, MLP_DIM, DIM, T = 32, 64, 16, 1.0

    key = jax.random.PRNGKey(0)
    k_param, k_data = jax.random.split(key)
    params = init_params(k_param, in_features=3 * H * W, hidden_dim=HIDDEN_DIM,
                         mlp_dim=MLP_DIM, dim=DIM)
    batch = jax.random.normal(k_data, (N, 2, H, W), jnp.float32)

    prepared, kpad = prepare_params(params, H, W, HIDDEN_DIM, MLP_DIM, DIM)
    fwd = jax.jit(functools.partial(siamese_forward, temperature=T,
                                    kpad=kpad, hw=H * W))
    loss = jax.block_until_ready(fwd(prepared, batch))
    assert loss.shape == () and jnp.isfinite(loss)
    print("KERNEL_OK")
</pallas_src>

<mosaic_0001>
module attributes {stable_mosaic.version = 11 : i64} {
  func.func @_backbone_kernel(%arg0: i32, %arg1: i32, %arg2: i32, %arg3: i32, %arg4: memref<8x256xf32, #tpu.memory_space<vmem>>, %arg5: memref<256x128xbf16, #tpu.memory_space<vmem>>, %arg6: memref<1x8x128xbf16, #tpu.memory_space<vmem>>, %arg7: memref<8x128xf32, #tpu.memory_space<vmem>>) attributes {dimension_semantics = [#tpu.dimension_semantics<parallel>, #tpu.dimension_semantics<parallel>, #tpu.dimension_semantics<parallel>, #tpu.dimension_semantics<arbitrary>], iteration_bounds = array<i64: 2, 1, 1, 1>, scalar_prefetch = 0 : i64, scratch_operands = 1 : i64, tpu.core_type = #tpu.core_type<tc>, window_params = [{transform_indices = @transform_0, window_bounds = array<i64: 8, 256>}, {transform_indices = @transform_1, window_bounds = array<i64: 256, 128>}, {transform_indices = @transform_2, window_bounds = array<i64: 1, 8, 128>}]} {
    %c0_i32 = arith.constant 0 : i32
    %0 = arith.cmpi eq, %arg3, %c0_i32 : i32
    %1 = arith.extui %0 : i1 to i32
    %c0_i32_0 = arith.constant 0 : i32
    %2 = arith.cmpi ne, %1, %c0_i32_0 : i32
    scf.if %2 {
      %cst_10 = arith.constant 0.000000e+00 : f32
      %13 = vector.broadcast %cst_10 : f32 to vector<8x128xf32>
      %c0_11 = arith.constant 0 : index
      %c0_12 = arith.constant 0 : index
      %14 = vector.load %arg7[%c0_11, %c0_12] : memref<8x128xf32, #tpu.memory_space<vmem>>, vector<8x128xf32>
      tpu.vector_store %arg7[%c0_11, %c0_12], %13 {strides = array<i32>} : memref<8x128xf32, #tpu.memory_space<vmem>>, vector<8x128xf32>,
    } else {
    }
    %c0 = arith.constant 0 : index
    %c0_1 = arith.constant 0 : index
    %3 = vector.load %arg7[%c0, %c0_1] : memref<8x128xf32, #tpu.memory_space<vmem>>, vector<8x128xf32>
    %c0_2 = arith.constant 0 : index
    %c0_3 = arith.constant 0 : index
    %4 = vector.load %arg4[%c0_2, %c0_3] : memref<8x256xf32, #tpu.memory_space<vmem>>, vector<8x256xf32>
    %5 = arith.truncf %4 : vector<8x256xf32> to vector<8x256xbf16>
    %c0_4 = arith.constant 0 : index
    %c0_5 = arith.constant 0 : index
    %6 = vector.load %arg5[%c0_4, %c0_5] : memref<256x128xbf16, #tpu.memory_space<vmem>>, vector<256x128xbf16>
    %cst = arith.constant dense<0.000000e+00> : vector<8x128xf32>
    %7 = tpu.matmul %5, %6, %cst {dimension_numbers = #tpu.dot_dimension_numbers<[1], [0], [0], [1], [0, 0, 1, 1], [], []>} : vector<8x256xbf16>, vector<256x128xbf16>, vector<8x128xf32> -> vector<8x128xf32>
    %8 = arith.addf %3, %7 : vector<8x128xf32>
    %c0_6 = arith.constant 0 : index
    %c0_7 = arith.constant 0 : index
    %9 = vector.load %arg7[%c0_6, %c0_7] : memref<8x128xf32, #tpu.memory_space<vmem>>, vector<8x128xf32>
    tpu.vector_store %arg7[%c0_6, %c0_7], %8 {strides = array<i32>} : memref<8x128xf32, #tpu.memory_space<vmem>>, vector<8x128xf32>,
    %c0_i32_8 = arith.constant 0 : i32
    %10 = arith.cmpi eq, %arg3, %c0_i32_8 : i32
    %11 = arith.extui %10 : i1 to i32
    %c0_i32_9 = arith.constant 0 : i32
    %12 = arith.cmpi ne, %11, %c0_i32_9 : i32
    scf.if %12 {
      %c0_10 = arith.constant 0 : index
      %c0_11 = arith.constant 0 : index
      %13 = vector.load %arg7[%c0_10, %c0_11] : memref<8x128xf32, #tpu.memory_space<vmem>>, vector<8x128xf32>
      %cst_12 = arith.constant 0.000000e+00 : f32
      %14 = vector.broadcast %cst_12 : f32 to vector<8x128xf32>
      %15 = arith.maximumf %13, %14 : vector<8x128xf32>
      %16 = arith.truncf %15 : vector<8x128xf32> to vector<8x128xbf16>
      %c0_13 = arith.constant 0 : index
      %c0_14 = arith.constant 0 : index
      %c0_15 = arith.constant 0 : index
      %17 = vector.load %arg6[%c0_13, %c0_14, %c0_15] : memref<1x8x128xbf16, #tpu.memory_space<vmem>>, vector<1x8x128xbf16>
      %18 = vector.shape_cast %17 : vector<1x8x128xbf16> to vector<8x128xbf16>
      %19 = vector.shape_cast %16 : vector<8x128xbf16> to vector<1x8x128xbf16>
      tpu.vector_store %arg6[%c0_13, %c0_14, %c0_15], %19 {strides = array<i32>} : memref<1x8x128xbf16, #tpu.memory_space<vmem>>, vector<1x8x128xbf16>,
    } else {
    }
    return
  }
  func.func @transform_0(%arg0: i32, %arg1: i32, %arg2: i32, %arg3: i32) -> (i32, i32) {
    %c1_i32 = arith.constant 1 : i32
    %0 = arith.muli %arg0, %c1_i32 : i32
    %1 = arith.addi %0, %arg3 : i32
    %c0_i32 = arith.constant 0 : i32
    return %arg1, %1 : i32, i32
  }
  func.func @transform_1(%arg0: i32, %arg1: i32, %arg2: i32, %arg3: i32) -> (i32, i32) {
    %c0_i32 = arith.constant 0 : i32
    return %arg3, %arg2 : i32, i32
  }
  func.func @transform_2(%arg0: i32, %arg1: i32, %arg2: i32, %arg3: i32) -> (i32, i32, i32) {
    %c0_i32 = arith.constant 0 : i32
    return %arg0, %arg1, %arg2 : i32, i32, i32
  }
}

module attributes {stable_mosaic.version = 11 : i64} {
  func.func @_predictor_loss_kernel(%arg0: memref<2x8x128xf32, #tpu.memory_space<vmem>>, %arg1: memref<128x128xbf16, #tpu.memory_space<vmem>>, %arg2: memref<1x128xf32, #tpu.memory_space<vmem>>, %arg3: memref<1x128xf32, #tpu.memory_space<vmem>>, %arg4: memref<128x128xbf16, #tpu.memory_space<vmem>>, %arg5: memref<1x1xf32, #tpu.memory_space<vmem>>) attributes {dimension_semantics = [], scalar_prefetch = 0 : i64, scratch_operands = 0 : i64, tpu.core_type = #tpu.core_type<tc>} {
    %c0 = arith.constant 0 : index
    %c0_0 = arith.constant 0 : index
    %c0_1 = arith.constant 0 : index
    %0 = vector.load %arg0[%c0, %c0_0, %c0_1] : memref<2x8x128xf32, #tpu.memory_space<vmem>>, vector<1x8x128xf32>
    %1 = vector.shape_cast %0 : vector<1x8x128xf32> to vector<8x128xf32>
    %c1 = arith.constant 1 : index
    %c0_2 = arith.constant 0 : index
    %c0_3 = arith.constant 0 : index
    %2 = vector.load %arg0[%c1, %c0_2, %c0_3] : memref<2x8x128xf32, #tpu.memory_space<vmem>>, vector<1x8x128xf32>
    %3 = vector.shape_cast %2 : vector<1x8x128xf32> to vector<8x128xf32>
    %4 = arith.truncf %1 : vector<8x128xf32> to vector<8x128xbf16>
    %c0_4 = arith.constant 0 : index
    %c0_5 = arith.constant 0 : index
    %5 = vector.load %arg1[%c0_4, %c0_5] : memref<128x128xbf16, #tpu.memory_space<vmem>>, vector<128x128xbf16>
    %cst = arith.constant dense<0.000000e+00> : vector<8x128xf32>
    %6 = tpu.matmul %4, %5, %cst {dimension_numbers = #tpu.dot_dimension_numbers<[1], [0], [0], [1], [0, 0, 1, 1], [], []>} : vector<8x128xbf16>, vector<128x128xbf16>, vector<8x128xf32> -> vector<8x128xf32>
    %c0_6 = arith.constant 0 : index
    %c0_7 = arith.constant 0 : index
    %7 = vector.load %arg2[%c0_6, %c0_7] : memref<1x128xf32, #tpu.memory_space<vmem>>, vector<1x128xf32>
    %c0_8 = arith.constant 0 : index
    %c0_9 = arith.constant 0 : index
    %8 = vector.load %arg3[%c0_8, %c0_9] : memref<1x128xf32, #tpu.memory_space<vmem>>, vector<1x128xf32>
    %cst_10 = arith.constant dense<0.000000e+00> : vector<128xf32>
    %9 = vector.multi_reduction <add>, %6, %cst_10 [0] : vector<8x128xf32> to vector<128xf32>
    %10 = vector.shape_cast %9 : vector<128xf32> to vector<1x128xf32>
    %cst_11 = arith.constant 8.000000e+00 : f32
    %11 = vector.broadcast %cst_11 : f32 to vector<1x128xf32>
    %12 = arith.divf %10, %11 : vector<1x128xf32>
    %13 = vector.broadcast %12 : vector<1x128xf32> to vector<8x128xf32>
    %14 = arith.subf %6, %13 : vector<8x128xf32>
    %15 = arith.mulf %14, %14 : vector<8x128xf32>
    %cst_12 = arith.constant dense<0.000000e+00> : vector<128xf32>
    %16 = vector.multi_reduction <add>, %15, %cst_12 [0] : vector<8x128xf32> to vector<128xf32>
    %17 = vector.shape_cast %16 : vector<128xf32> to vector<1x128xf32>
    %cst_13 = arith.constant 8.000000e+00 : f32
    %18 = vector.broadcast %cst_13 : f32 to vector<1x128xf32>
    %19 = arith.divf %17, %18 : vector<1x128xf32>
    %20 = vector.broadcast %12 : vector<1x128xf32> to vector<8x128xf32>
    %21 = arith.subf %6, %20 : vector<8x128xf32>
    %cst_14 = arith.constant 9.99999974E-6 : f32
    %22 = vector.broadcast %cst_14 : f32 to vector<1x128xf32>
    %23 = arith.addf %19, %22 : vector<1x128xf32>
    %24 = math.rsqrt %23 : vector<1x128xf32>
    %25 = vector.broadcast %24 : vector<1x128xf32> to vector<8x128xf32>
    %26 = arith.mulf %21, %25 : vector<8x128xf32>
    %27 = vector.broadcast %7 : vector<1x128xf32> to vector<8x128xf32>
    %28 = arith.mulf %26, %27 : vector<8x128xf32>
    %29 = vector.broadcast %8 : vector<1x128xf32> to vector<8x128xf32>
    %30 = arith.addf %28, %29 : vector<8x128xf32>
    %cst_15 = arith.constant 0.000000e+00 : f32
    %31 = vector.broadcast %cst_15 : f32 to vector<8x128xf32>
    %32 = arith.maximumf %30, %31 : vector<8x128xf32>
    %33 = arith.truncf %32 : vector<8x128xf32> to vector<8x128xbf16>
    %c0_16 = arith.constant 0 : index
    %c0_17 = arith.constant 0 : index
    %34 = vector.load %arg4[%c0_16, %c0_17] : memref<128x128xbf16, #tpu.memory_space<vmem>>, vector<128x128xbf16>
    %cst_18 = arith.constant dense<0.000000e+00> : vector<8x128xf32>
    %35 = tpu.matmul %33, %34, %cst_18 {dimension_numbers = #tpu.dot_dimension_numbers<[1], [0], [0], [1], [0, 0, 1, 1], [], []>} : vector<8x128xbf16>, vector<128x128xbf16>, vector<8x128xf32> -> vector<8x128xf32>
    %36 = arith.mulf %35, %35 : vector<8x128xf32>
    %cst_19 = arith.constant dense<0.000000e+00> : vector<8xf32>
    %37 = vector.multi_reduction <add>, %36, %cst_19 [1] : vector<8x128xf32> to vector<8xf32>
    %38 = vector.shape_cast %37 : vector<8xf32> to vector<8x1xf32>
    %cst_20 = arith.constant 1.000000e-24 : f32
    %39 = vector.broadcast %cst_20 : f32 to vector<8x1xf32>
    %40 = arith.maximumf %38, %39 : vector<8x1xf32>
    %41 = math.rsqrt %40 : vector<8x1xf32>
    %42 = vector.broadcast %41 : vector<8x1xf32> to vector<8x128xf32>
    %43 = arith.mulf %35, %42 : vector<8x128xf32>
    %44 = arith.mulf %3, %3 : vector<8x128xf32>
    %cst_21 = arith.constant dense<0.000000e+00> : vector<8xf32>
    %45 = vector.multi_reduction <add>, %44, %cst_21 [1] : vector<8x128xf32> to vector<8xf32>
    %46 = vector.shape_cast %45 : vector<8xf32> to vector<8x1xf32>
    %cst_22 = arith.constant 1.000000e-24 : f32
    %47 = vector.broadcast %cst_22 : f32 to vector<8x1xf32>
    %48 = arith.maximumf %46, %47 : vector<8x1xf32>
    %49 = math.rsqrt %48 : vector<8x1xf32>
    %50 = vector.broadcast %49 : vector<8x1xf32> to vector<8x128xf32>
    %51 = arith.mulf %3, %50 : vector<8x128xf32>
    %cst_23 = arith.constant dense<0.000000e+00> : vector<8x8xf32>
    %52 = tpu.matmul %43, %51, %cst_23 {dimension_numbers = #tpu.dot_dimension_numbers<[1], [1], [0], [0], [0, 0, 1, 0], [], []>} : vector<8x128xf32>, vector<8x128xf32>, vector<8x8xf32> -> vector<8x8xf32>
    %cst_24 = arith.constant 1.000000e+00 : f32
    %53 = vector.broadcast %cst_24 : f32 to vector<8x8xf32>
    %54 = arith.mulf %52, %53 : vector<8x8xf32>
    %cst_25 = arith.constant dense<0.000000e+00> : vector<8x8xf32>
    %55 = tpu.matmul %51, %43, %cst_25 {dimension_numbers = #tpu.dot_dimension_numbers<[1], [1], [0], [0], [0, 0, 1, 0], [], []>} : vector<8x128xf32>, vector<8x128xf32>, vector<8x8xf32> -> vector<8x8xf32>
    %cst_26 = arith.constant 1.000000e+00 : f32
    %56 = vector.broadcast %cst_26 : f32 to vector<8x8xf32>
    %57 = arith.mulf %55, %56 : vector<8x8xf32>
    %58 = tpu.iota {dimensions = array<i32: 0>} : vector<8x8xi32>
    %59 = tpu.iota {dimensions = array<i32: 1>} : vector<8x8xi32>
    %60 = arith.cmpi eq, %58, %59 : vector<8x8xi32>
    %cst_27 = arith.constant 0.000000e+00 : f32
    %61 = vector.broadcast %cst_27 : f32 to vector<8x8xf32>
    %62 = arith.select %60, %54, %61 : vector<8x8xi1>, vector<8x8xf32>
    %cst_28 = arith.constant dense<0.000000e+00> : vector<8xf32>
    %63 = vector.multi_reduction <add>, %62, %cst_28 [1] : vector<8x8xf32> to vector<8xf32>
    %64 = vector.shape_cast %63 : vector<8xf32> to vector<8x1xf32>
    %cst_29 = arith.constant dense<0xFF800000> : vector<8xf32>
    %65 = vector.multi_reduction <maximumf>, %54, %cst_29 [1] : vector<8x8xf32> to vector<8xf32>
    %66 = vector.shape_cast %65 : vector<8xf32> to vector<8x1xf32>
    %67 = vector.broadcast %66 : vector<8x1xf32> to vector<8x8xf32>
    %68 = arith.subf %54, %67 : vector<8x8xf32>
    %69 = math.exp %68 : vector<8x8xf32>
    %cst_30 = arith.constant dense<0.000000e+00> : vector<8xf32>
    %70 = vector.multi_reduction <add>, %69, %cst_30 [1] : vector<8x8xf32> to vector<8xf32>
    %71 = vector.shape_cast %70 : vector<8xf32> to vector<8x1xf32>
    %72 = math.log %71 : vector<8x1xf32>
    %73 = arith.addf %72, %66 : vector<8x1xf32>
    %74 = arith.subf %73, %64 : vector<8x1xf32>
    %75 = vector.shape_cast %74 : vector<8x1xf32> to vector<1x8x1xf32>
    %cst_31 = arith.constant dense<0.000000e+00> : vector<1xf32>
    %76 = vector.multi_reduction <add>, %75, %cst_31 [1, 2] : vector<1x8x1xf32> to vector<1xf32>
    %77 = vector.shape_cast %76 : vector<1xf32> to vector<1x1x1xf32>
    %78 = vector.extract %77[0, 0, 0] : f32 from vector<1x1x1xf32>
    %cst_32 = arith.constant 8.000000e+00 : f32
    %79 = arith.divf %78, %cst_32 : f32
    %cst_33 = arith.constant 0.000000e+00 : f32
    %80 = vector.broadcast %cst_33 : f32 to vector<8x8xf32>
    %81 = arith.select %60, %57, %80 : vector<8x8xi1>, vector<8x8xf32>
    %cst_34 = arith.constant dense<0.000000e+00> : vector<8xf32>
    %82 = vector.multi_reduction <add>, %81, %cst_34 [1] : vector<8x8xf32> to vector<8xf32>
    %83 = vector.shape_cast %82 : vector<8xf32> to vector<8x1xf32>
    %cst_35 = arith.constant dense<0xFF800000> : vector<8xf32>
    %84 = vector.multi_reduction <maximumf>, %57, %cst_35 [1] : vector<8x8xf32> to vector<8xf32>
    %85 = vector.shape_cast %84 : vector<8xf32> to vector<8x1xf32>
    %86 = vector.broadcast %85 : vector<8x1xf32> to vector<8x8xf32>
    %87 = arith.subf %57, %86 : vector<8x8xf32>
    %88 = math.exp %87 : vector<8x8xf32>
    %cst_36 = arith.constant dense<0.000000e+00> : vector<8xf32>
    %89 = vector.multi_reduction <add>, %88, %cst_36 [1] : vector<8x8xf32> to vector<8xf32>
    %90 = vector.shape_cast %89 : vector<8xf32> to vector<8x1xf32>
    %91 = math.log %90 : vector<8x1xf32>
    %92 = arith.addf %91, %85 : vector<8x1xf32>
    %93 = arith.subf %92, %83 : vector<8x1xf32>
    %94 = vector.shape_cast %93 : vector<8x1xf32> to vector<1x8x1xf32>
    %cst_37 = arith.constant dense<0.000000e+00> : vector<1xf32>
    %95 = vector.multi_reduction <add>, %94, %cst_37 [1, 2] : vector<1x8x1xf32> to vector<1xf32>
    %96 = vector.shape_cast %95 : vector<1xf32> to vector<1x1x1xf32>
    %97 = vector.extract %96[0, 0, 0] : f32 from vector<1x1x1xf32>
    %cst_38 = arith.constant 8.000000e+00 : f32
    %98 = arith.divf %97, %cst_38 : f32
    %99 = arith.addf %79, %98 : f32
    %cst_39 = arith.constant 2.000000e+00 : f32
    %100 = arith.mulf %99, %cst_39 : f32
    %101 = vector.broadcast %100 : f32 to vector<1x1xf32>
    %c0_40 = arith.constant 0 : index
    %c0_41 = arith.constant 0 : index
    %102 = vector.load %arg5[%c0_40, %c0_41] : memref<1x1xf32, #tpu.memory_space<vmem>>, vector<1x1xf32>
    tpu.vector_store %arg5[%c0_40, %c0_41], %101 {strides = array<i32>} : memref<1x1xf32, #tpu.memory_space<vmem>>, vector<1x1xf32>,
    return
  }
}

module attributes {stable_mosaic.version = 11 : i64} {
  func.func @_encoder_head_kernel(%arg0: i32, %arg1: i32, %arg2: memref<1x8x128xbf16, #tpu.memory_space<vmem>>, %arg3: memref<128x128xbf16, #tpu.memory_space<vmem>>, %arg4: memref<1x128xf32, #tpu.memory_space<vmem>>, %arg5: memref<1x128xf32, #tpu.memory_space<vmem>>, %arg6: memref<128x128xbf16, #tpu.memory_space<vmem>>, %arg7: memref<1x8x128xf32, #tpu.memory_space<vmem>>, %arg8: memref<8x128xf32, #tpu.memory_space<vmem>>) attributes {dimension_semantics = [#tpu.dimension_semantics<parallel>, #tpu.dimension_semantics<arbitrary>], iteration_bounds = array<i64: 2, 1>, scalar_prefetch = 0 : i64, scratch_operands = 1 : i64, tpu.core_type = #tpu.core_type<tc>, window_params = [{transform_indices = @transform_0, window_bounds = array<i64: 1, 8, 128>}, {transform_indices = @transform_1, window_bounds = array<i64: 128, 128>}, {transform_indices = @transform_2, window_bounds = array<i64: 1, 128>}, {transform_indices = @transform_3, window_bounds = array<i64: 1, 128>}, {transform_indices = @transform_4, window_bounds = array<i64: 128, 128>}, {transform_indices = @transform_5, window_bounds = array<i64: 1, 8, 128>}]} {
    %c0_i32 = arith.constant 0 : i32
    %0 = arith.cmpi eq, %arg1, %c0_i32 : i32
    %1 = arith.extui %0 : i1 to i32
    %c0_i32_0 = arith.constant 0 : i32
    %2 = arith.cmpi ne, %1, %c0_i32_0 : i32
    scf.if %2 {
      %cst_24 = arith.constant 0.000000e+00 : f32
      %42 = vector.broadcast %cst_24 : f32 to vector<8x128xf32>
      %c0_25 = arith.constant 0 : index
      %c0_26 = arith.constant 0 : index
      %43 = vector.load %arg8[%c0_25, %c0_26] : memref<8x128xf32, #tpu.memory_space<vmem>>, vector<8x128xf32>
      tpu.vector_store %arg8[%c0_25, %c0_26], %42 {strides = array<i32>} : memref<8x128xf32, #tpu.memory_space<vmem>>, vector<8x128xf32>,
    } else {
    }
    %c0 = arith.constant 0 : index
    %c0_1 = arith.constant 0 : index
    %c0_2 = arith.constant 0 : index
    %3 = vector.load %arg2[%c0, %c0_1, %c0_2] : memref<1x8x128xbf16, #tpu.memory_space<vmem>>, vector<1x8x128xbf16>
    %4 = vector.shape_cast %3 : vector<1x8x128xbf16> to vector<8x128xbf16>
    %c0_3 = arith.constant 0 : index
    %c0_4 = arith.constant 0 : index
    %5 = vector.load %arg3[%c0_3, %c0_4] : memref<128x128xbf16, #tpu.memory_space<vmem>>, vector<128x128xbf16>
    %cst = arith.constant dense<0.000000e+00> : vector<8x128xf32>
    %6 = tpu.matmul %4, %5, %cst {dimension_numbers = #tpu.dot_dimension_numbers<[1], [0], [0], [1], [0, 0, 1, 1], [], []>} : vector<8x128xbf16>, vector<128x128xbf16>, vector<8x128xf32> -> vector<8x128xf32>
    %c0_5 = arith.constant 0 : index
    %c0_6 = arith.constant 0 : index
    %7 = vector.load %arg4[%c0_5, %c0_6] : memref<1x128xf32, #tpu.memory_space<vmem>>, vector<1x128xf32>
    %c0_7 = arith.constant 0 : index
    %c0_8 = arith.constant 0 : index
    %8 = vector.load %arg5[%c0_7, %c0_8] : memref<1x128xf32, #tpu.memory_space<vmem>>, vector<1x128xf32>
    %cst_9 = arith.constant dense<0.000000e+00> : vector<128xf32>
    %9 = vector.multi_reduction <add>, %6, %cst_9 [0] : vector<8x128xf32> to vector<128xf32>
    %10 = vector.shape_cast %9 : vector<128xf32> to vector<1x128xf32>
    %cst_10 = arith.constant 8.000000e+00 : f32
    %11 = vector.broadcast %cst_10 : f32 to vector<1x128xf32>
    %12 = arith.divf %10, %11 : vector<1x128xf32>
    %13 = vector.broadcast %12 : vector<1x128xf32> to vector<8x128xf32>
    %14 = arith.subf %6, %13 : vector<8x128xf32>
    %15 = arith.mulf %14, %14 : vector<8x128xf32>
    %cst_11 = arith.constant dense<0.000000e+00> : vector<128xf32>
    %16 = vector.multi_reduction <add>, %15, %cst_11 [0] : vector<8x128xf32> to vector<128xf32>
    %17 = vector.shape_cast %16 : vector<128xf32> to vector<1x128xf32>
    %cst_12 = arith.constant 8.000000e+00 : f32
    %18 = vector.broadcast %cst_12 : f32 to vector<1x128xf32>
    %19 = arith.divf %17, %18 : vector<1x128xf32>
    %20 = vector.broadcast %12 : vector<1x128xf32> to vector<8x128xf32>
    %21 = arith.subf %6, %20 : vector<8x128xf32>
    %cst_13 = arith.constant 9.99999974E-6 : f32
    %22 = vector.broadcast %cst_13 : f32 to vector<1x128xf32>
    %23 = arith.addf %19, %22 : vector<1x128xf32>
    %24 = math.rsqrt %23 : vector<1x128xf32>
    %25 = vector.broadcast %24 : vector<1x128xf32> to vector<8x128xf32>
    %26 = arith.mulf %21, %25 : vector<8x128xf32>
    %27 = vector.broadcast %7 : vector<1x128xf32> to vector<8x128xf32>
    %28 = arith.mulf %26, %27 : vector<8x128xf32>
    %29 = vector.broadcast %8 : vector<1x128xf32> to vector<8x128xf32>
    %30 = arith.addf %28, %29 : vector<8x128xf32>
    %cst_14 = arith.constant 0.000000e+00 : f32
    %31 = vector.broadcast %cst_14 : f32 to vector<8x128xf32>
    %32 = arith.maximumf %30, %31 : vector<8x128xf32>
    %c0_15 = arith.constant 0 : index
    %c0_16 = arith.constant 0 : index
    %33 = vector.load %arg8[%c0_15, %c0_16] : memref<8x128xf32, #tpu.memory_space<vmem>>, vector<8x128xf32>
    %34 = arith.truncf %32 : vector<8x128xf32> to vector<8x128xbf16>
    %c0_17 = arith.constant 0 : index
    %c0_18 = arith.constant 0 : index
    %35 = vector.load %arg6[%c0_17, %c0_18] : memref<128x128xbf16, #tpu.memory_space<vmem>>, vector<128x128xbf16>
    %cst_19 = arith.constant dense<0.000000e+00> : vector<8x128xf32>
    %36 = tpu.matmul %34, %35, %cst_19 {dimension_numbers = #tpu.dot_dimension_numbers<[1], [0], [0], [1], [0, 0, 1, 1], [], []>} : vector<8x128xbf16>, vector<128x128xbf16>, vector<8x128xf32> -> vector<8x128xf32>
    %37 = arith.addf %33, %36 : vector<8x128xf32>
    %c0_20 = arith.constant 0 : index
    %c0_21 = arith.constant 0 : index
    %38 = vector.load %arg8[%c0_20, %c0_21] : memref<8x128xf32, #tpu.memory_space<vmem>>, vector<8x128xf32>
    tpu.vector_store %arg8[%c0_20, %c0_21], %37 {strides = array<i32>} : memref<8x128xf32, #tpu.memory_space<vmem>>, vector<8x128xf32>,
    %c0_i32_22 = arith.constant 0 : i32
    %39 = arith.cmpi eq, %arg1, %c0_i32_22 : i32
    %40 = arith.extui %39 : i1 to i32
    %c0_i32_23 = arith.constant 0 : i32
    %41 = arith.cmpi ne, %40, %c0_i32_23 : i32
    scf.if %41 {
      %c0_24 = arith.constant 0 : index
      %c0_25 = arith.constant 0 : index
      %42 = vector.load %arg8[%c0_24, %c0_25] : memref<8x128xf32, #tpu.memory_space<vmem>>, vector<8x128xf32>
      %cst_26 = arith.constant dense<0.000000e+00> : vector<128xf32>
      %43 = vector.multi_reduction <add>, %42, %cst_26 [0] : vector<8x128xf32> to vector<128xf32>
      %44 = vector.shape_cast %43 : vector<128xf32> to vector<1x128xf32>
      %cst_27 = arith.constant 8.000000e+00 : f32
      %45 = vector.broadcast %cst_27 : f32 to vector<1x128xf32>
      %46 = arith.divf %44, %45 : vector<1x128xf32>
      %47 = vector.broadcast %46 : vector<1x128xf32> to vector<8x128xf32>
      %48 = arith.subf %42, %47 : vector<8x128xf32>
      %49 = arith.mulf %48, %48 : vector<8x128xf32>
      %cst_28 = arith.constant dense<0.000000e+00> : vector<128xf32>
      %50 = vector.multi_reduction <add>, %49, %cst_28 [0] : vector<8x128xf32> to vector<128xf32>
      %51 = vector.shape_cast %50 : vector<128xf32> to vector<1x128xf32>
      %cst_29 = arith.constant 8.000000e+00 : f32
      %52 = vector.broadcast %cst_29 : f32 to vector<1x128xf32>
      %53 = arith.divf %51, %52 : vector<1x128xf32>
      %54 = vector.broadcast %46 : vector<1x128xf32> to vector<8x128xf32>
      %55 = arith.subf %42, %54 : vector<8x128xf32>
      %cst_30 = arith.constant 9.99999974E-6 : f32
      %56 = vector.broadcast %cst_30 : f32 to vector<1x128xf32>
      %57 = arith.addf %53, %56 : vector<1x128xf32>
      %58 = math.rsqrt %57 : vector<1x128xf32>
      %59 = vector.broadcast %58 : vector<1x128xf32> to vector<8x128xf32>
      %60 = arith.mulf %55, %59 : vector<8x128xf32>
      %c0_31 = arith.constant 0 : index
      %c0_32 = arith.constant 0 : index
      %c0_33 = arith.constant 0 : index
      %61 = vector.load %arg7[%c0_31, %c0_32, %c0_33] : memref<1x8x128xf32, #tpu.memory_space<vmem>>, vector<1x8x128xf32>
      %62 = vector.shape_cast %61 : vector<1x8x128xf32> to vector<8x128xf32>
      %63 = vector.shape_cast %60 : vector<8x128xf32> to vector<1x8x128xf32>
      tpu.vector_store %arg7[%c0_31, %c0_32, %c0_33], %63 {strides = array<i32>} : memref<1x8x128xf32, #tpu.memory_space<vmem>>, vector<1x8x128xf32>,
    } else {
    }
    return
  }
  func.func @transform_0(%arg0: i32, %arg1: i32) -> (i32, i32, i32) {
    %c0_i32 = arith.constant 0 : i32
    %c0_i32_0 = arith.constant 0 : i32
    %c0_i32_1 = arith.constant 0 : i32
    return %arg0, %c0_i32, %c0_i32_0 : i32, i32, i32
  }
  func.func @transform_1(%arg0: i32, %arg1: i32) -> (i32, i32) {
    %c0_i32 = arith.constant 0 : i32
    %c0_i32_0 = arith.constant 0 : i32
    return %c0_i32, %arg1 : i32, i32
  }
  func.func @transform_2(%arg0: i32, %arg1: i32) -> (i32, i32) {
    %c0_i32 = arith.constant 0 : i32
    %c0_i32_0 = arith.constant 0 : i32
    return %c0_i32, %arg1 : i32, i32
  }
  func.func @transform_3(%arg0: i32, %arg1: i32) -> (i32, i32) {
    %c0_i32 = arith.constant 0 : i32
    %c0_i32_0 = arith.constant 0 : i32
    return %c0_i32, %arg1 : i32, i32
  }
  func.func @transform_4(%arg0: i32, %arg1: i32) -> (i32, i32) {
    %c0_i32 = arith.constant 0 : i32
    %c0_i32_0 = arith.constant 0 : i32
    return %arg1, %c0_i32 : i32, i32
  }
  func.func @transform_5(%arg0: i32, %arg1: i32) -> (i32, i32, i32) {
    %c0_i32 = arith.constant 0 : i32
    %c0_i32_0 = arith.constant 0 : i32
    %c0_i32_1 = arith.constant 0 : i32
    return %arg0, %c0_i32, %c0_i32_0 : i32, i32, i32
  }
}

</mosaic_0001>

<llo_original>
// kernel: siamese_forward.3
$region0: #{siamese_forward.3}
  #allocation0 [shape = 'u32[]', space=smem, size = 0x4, offset = 0x4, fixed_abs, tag = 'smem constant byte address 0x4 - core index']
  #allocation1 [shape = 'u32[72,128]{1,0:T(1,128)}', space=vmem, size = 0x9000, scoped, tag = 'internal scratch']
  #allocation2 [shape = 'f32[8,128]{1,0:T(8,128)}', space=vmem, size = 0x1000, scoped, tag = 'scratch operand']
  %s0 = inlined_call_operand.vmem [shape: f32[8,512], index: 0, kind: input, shape index: {}]
  %s1 = inlined_call_operand.vmem [shape: bf16[256,128], index: 1, kind: input, shape index: {}]
  %s2 = inlined_call_operand.vmem [shape: bf16[2,8,128], index: 2, kind: output, shape index: {}]
  %s3 = sld [smem:[#allocation0]]
  $region49: #{siamese_forward.3} parent=0
    _
  %s5 = ssub.s32 1, %s3
  %s6 = scalar_select 0, %s5, %s3
  loop: start=0, step=1, limit=4
  $region2: #{siamese_forward.3} parent=0 // loop_pre_header
    _
  $region3: #{siamese_forward.3} parent=0 // loop_header
    %s8 = sphi 0, %s12
    %p9 = scmp.ge.s32.totalorder %s8, 4
    %s15 = sphi 0, %s41
    %s16 = sphi 0, %s37
    %s17 = sphi 0, %s33
    %s18 = sphi 0, %s29
    %s19 = sphi 0, %s15
    %s20 = sphi 0, %s16
    %s21 = sphi 0, %s17
    %s22 = sphi 0, %s18
    %s23 = sphi 0, %s19
    %s24 = sphi 0, %s20
    %s25 = sphi 0, %s21
    %s26 = sphi 0, %s22
    %s48 = sphi 0, %s50
    %s51 = sphi 0, %s48
    %s52 = sphi 0, %s51
    %s68 = sphi 0, %s52
    %s76 = sphi 0, %s78
    %s79 = sphi 0, %s76
    %s80 = sphi 0, %s79
    %s96 = sphi 0, %s80
    %s106 = sphi 0, %s108
    %s109 = sphi 0, %s106
    %s110 = sphi 0, %s109
    %s126 = sphi 0, %s110
  $region4: #{siamese_forward.3} parent=0 // loop_header_branch
    %11 = sbr.rel (%p9) target = $region8
  $region5: #{siamese_forward.3} parent=0 // loop_body
    %s13 = ssub.s32 %s8, 1
    %s14 = ssub.s32 %s8, 2
    %s27 = sadd.s32 1, %s18
    %p28 = scmp.ge.s32.totalorder %s27, 1
    %s29 = scalar_select %p28, 0, %s27
    %s30 = sadd.s32 1, %s17
    %s31 = scalar_select %p28, %s30, %s17
    %p32 = scmp.ge.s32.totalorder %s31, 1
    %s33 = scalar_select %p32, 0, %s31
    %s34 = sadd.s32 1, %s16
    %s35 = scalar_select %p32, %s34, %s16
    %p36 = scmp.ge.s32.totalorder %s35, 1
    %s37 = scalar_select %p36, 0, %s35
    %s38 = sadd.s32 1, %s15
    %s39 = scalar_select %p36, %s38, %s15
    %p40 = scmp.ge.s32.totalorder %s39, 2
    %s41 = scalar_select %p40, 0, %s39
    %s42 = sadd.s32 %s15, %s18
    %s43 = sadd.s32 %s41, %s29
    %s44 = ssub.s32 %s16, %s37
    %s45 = ssub.s32 %s42, %s43
    %s46 = sor.u32 %s44, %s45
    %p47 = scmp.eq.s32.totalorder %s46, 0
    %s49 = sadd.s32 %s48, 1
    %s50 = scalar_select %p47, %s48, %s49
    %p53 = pneg %p47
    %p54 = scmp.eq.s32.totalorder %s8, 1
    %p55 = por %p53, %p54
    %p56 = scmp.ne.s32.totalorder %s48, %s51
    %p57 = scmp.eq.s32.totalorder %s8, 0
    %p58 = por %p56, %p57
    %p59 = scmp.ne.s32.totalorder %s48, %s51
    %p60 = scmp.eq.s32.totalorder %s13, 1
    %p61 = por %p59, %p60
    %p62 = scmp.ne.s32.totalorder %s51, %s52
    %p63 = scmp.eq.s32.totalorder %s13, 0
    %p64 = por %p62, %p63
    %p65 = scmp.ne.s32.totalorder %s51, %s52
    %p66 = scmp.eq.s32.totalorder %s14, 1
    %p67 = por %p65, %p66
    %p69 = scmp.ne.s32.totalorder %s52, %s68
    %p70 = scmp.eq.s32.totalorder %s14, 0
    %p71 = por %p69, %p70
    %s72 = ssub.s32 %s18, %s29
    %s73 = ssub.s32 %s17, %s33
    %s74 = sor.u32 %s72, %s73
    %p75 = scmp.eq.s32.totalorder %s74, 0
    %s77 = sadd.s32 %s76, 1
    %s78 = scalar_select %p75, %s76, %s77
    %p81 = pneg %p75
    %p82 = scmp.eq.s32.totalorder %s8, 1
    %p83 = por %p81, %p82
    %p84 = scmp.ne.s32.totalorder %s76, %s79
    %p85 = scmp.eq.s32.totalorder %s8, 0
    %p86 = por %p84, %p85
    %p87 = scmp.ne.s32.totalorder %s76, %s79
    %p88 = scmp.eq.s32.totalorder %s13, 1
    %p89 = por %p87, %p88
    %p90 = scmp.ne.s32.totalorder %s79, %s80
    %p91 = scmp.eq.s32.totalorder %s13, 0
    %p92 = por %p90, %p91
    %p93 = scmp.ne.s32.totalorder %s79, %s80
    %p94 = scmp.eq.s32.totalorder %s14, 1
    %p95 = por %p93, %p94
    %p97 = scmp.ne.s32.totalorder %s80, %s96
    %p98 = scmp.eq.s32.totalorder %s14, 0
    %p99 = por %p97, %p98
    %s100 = ssub.s32 %s15, %s41
    %s101 = ssub.s32 %s16, %s37
    %s102 = sor.u32 %s100, %s101
    %s103 = ssub.s32 %s17, %s33
    %s104 = sor.u32 %s102, %s103
    %p105 = scmp.eq.s32.totalorder %s104, 0
    %s107 = sadd.s32 %s106, 1
    %s108 = scalar_select %p105, %s106, %s107
    %p111 = pneg %p105
    %p112 = scmp.eq.s32.totalorder %s8, 1
    %p113 = por %p111, %p112
    %p114 = scmp.ne.s32.totalorder %s106, %s109
    %p115 = scmp.eq.s32.totalorder %s8, 0
    %p116 = por %p114, %p115
    %p117 = scmp.ne.s32.totalorder %s106, %s109
    %p118 = scmp.eq.s32.totalorder %s13, 1
    %p119 = por %p117, %p118
    %p120 = scmp.ne.s32.totalorder %s109, %s110
    %p121 = scmp.eq.s32.totalorder %s13, 0
    %p122 = por %p120, %p121
    %p123 = scmp.ne.s32.totalorder %s109, %s110
    %p124 = scmp.eq.s32.totalorder %s14, 1
    %p125 = por %p123, %p124
    %p127 = scmp.ne.s32.totalorder %s110, %s126
    %p128 = scmp.eq.s32.totalorder %s14, 0
    %p129 = por %p127, %p128
    %p130 = scmp.le.s32.totalorder 1, %s8
    %p131 = scmp.lt.s32.totalorder %s8, 3
    %p132 = pnand %p130, %p131
    %p133 = pneg %p132
    // Predicated region
    $region9: #{siamese_forward.3} parent=5 // pred_check
      _
    $region10: #{siamese_forward.3} parent=5 // pred_check_branch
      %135 = sbr.rel (%p132) target = $region12
    $region11: #{siamese_forward.3} parent=5 // pred_region
      %s136 = ssub.s32 %s8, 1
      // Predicated region
      $region13: #{siamese_forward.3} parent=11 // pred_check
        %p137 = pneg %p92
      $region14: #{siamese_forward.3} parent=11 // pred_check_branch
        %139 = sbr.rel (%p137) target = $region16
      $region15: #{siamese_forward.3} parent=11 // pred_region
        %s140 = smul.u32 32, %s22
        %p141 = scmp.lt.s32.totalorder %s140, 31
        %s142 = scalar_select %p141, %s140, 31
        %p143 = scmp.lt.s32.totalorder %s21, 0
        %s144 = scalar_select %p143, %s21, 0
        %s145 = sadd.s32 %s144, %s142
        %s146 = smul.addr %s145, 4
        %s147 = scalar_lea.vmem %s1, %s146
        %s148 = smul.u32 32, %s22
      $region16: #{siamese_forward.3} parent=11 // pred_fallthru
        _
    $region12: #{siamese_forward.3} parent=5 // pred_fallthru
      _
    %p149 = scmp.lt.s32.totalorder %s8, 2
    // Predicated region
    $region17: #{siamese_forward.3} parent=5 // pred_check
      %p150 = pneg %p149
    $region18: #{siamese_forward.3} parent=5 // pred_check_branch
      %152 = sbr.rel (%p150) target = $region20
    $region19: #{siamese_forward.3} parent=5 // pred_region
      // Predicated region
      $region21: #{siamese_forward.3} parent=19 // pred_check
        %p153 = pneg %p58
      $region22: #{siamese_forward.3} parent=19 // pred_check_branch
        %155 = sbr.rel (%p153) target = $region24
      $region23: #{siamese_forward.3} parent=19 // pred_region
        %s156 = sadd.s32 %s15, %s18
        %s157 = smul.u32 2, %s156
        %p158 = scmp.lt.s32.totalorder %s16, 0
        %s159 = scalar_select %p158, %s16, 0
        %p160 = scmp.lt.s32.totalorder %s157, 3
        %s161 = scalar_select %p160, %s157, 3
        %s162 = smul.addr %s159, 4
        %s163 = sadd.s32 %s161, %s162
        %s164 = smul.addr %s163, 8
        %s165 = scalar_lea.vmem %s0, %s164
        %s166 = sadd.s32 %s15, %s18
        %s167 = smul.u32 2, %s166
      $region24: #{siamese_forward.3} parent=19 // pred_fallthru
        _
    $region20: #{siamese_forward.3} parent=5 // pred_fallthru
      _
    %p168 = scmp.le.s32.totalorder 1, %s8
    %p169 = scmp.lt.s32.totalorder %s8, 3
    %p170 = pnand %p168, %p169
    %p171 = pneg %p170
    // Predicated region
    $region25: #{siamese_forward.3} parent=5 // pred_check
      _
    $region26: #{siamese_forward.3} parent=5 // pred_check_branch
      %173 = sbr.rel (%p170) target = $region28
    $region27: #{siamese_forward.3} parent=5 // pred_region
      %s174 = ssub.s32 %s8, 1
      %s175 = sadd.s32 %s19, %s22
      %s176 = smul.u32 2, %s175
      %p177 = scmp.lt.s32.totalorder %s20, 0
      %s178 = scalar_select %p177, %s20, 0
      %p179 = scmp.lt.s32.totalorder %s176, 3
      %s180 = scalar_select %p179, %s176, 3
      %s181 = smul.addr %s178, 4
      %s182 = sadd.s32 %s180, %s181
      %s183 = smul.addr %s182, 8
      %s184 = scalar_lea.vmem %s0, %s183
      %p185 = pneg %p64
      %p186 = pneg %p61
      %s187 = smul.u32 32, %s22
      %p188 = scmp.lt.s32.totalorder %s187, 31
      %s189 = scalar_select %p188, %s187, 31
      %p190 = scmp.lt.s32.totalorder %s21, 0
      %s191 = scalar_select %p190, %s21, 0
      %s192 = sadd.s32 %s191, %s189
      %s193 = smul.addr %s192, 4
      %s194 = scalar_lea.vmem %s1, %s193
      %p195 = pneg %p92
      %p196 = pneg %p89
      %p197 = pneg %p122
      %p198 = pneg %p119
      %p199 = scmp.lt.s32.totalorder %s19, 1
      %s200 = scalar_select %p199, %s19, 1
      %p201 = scmp.lt.s32.totalorder %s20, 0
      %s202 = scalar_select %p201, %s20, 0
      %p203 = scmp.lt.s32.totalorder %s21, 0
      %s204 = scalar_select %p203, %s21, 0
      %s205 = sadd.s32 %s204, %s202
      %s206 = sadd.s32 %s205, %s200
      %s207 = smul.addr %s206, 4
      %s208 = scalar_lea.vmem %s2, %s207
      %s209 = sadd.s32 %s19, %s22
      %s210 = smul.u32 2, %s209
      %p211 = scmp.lt.s32.totalorder %s20, 0
      %s212 = scalar_select %p211, %s20, 0
      %p213 = scmp.lt.s32.totalorder %s210, 3
      %s214 = scalar_select %p213, %s210, 3
      %s215 = smul.addr %s212, 4
      %s216 = sadd.s32 %s214, %s215
      %s217 = smul.addr %s216, 8
      %s218 = scalar_lea.vmem %s0, %s217
      %s219 = sadd.s32 %s19, %s22
      %s220 = smul.u32 2, %s219
      %s221 = smul.u32 32, %s22
      %p222 = scmp.lt.s32.totalorder %s221, 31
      %s223 = scalar_select %p222, %s221, 31
      %p224 = scmp.lt.s32.totalorder %s21, 0
      %s225 = scalar_select %p224, %s21, 0
      %s226 = sadd.s32 %s225, %s223
      %s227 = smul.addr %s226, 4
      %s228 = scalar_lea.vmem %s1, %s227
      %s229 = smul.u32 32, %s22
      %p230 = scmp.lt.s32.totalorder %s19, 1
      %s231 = scalar_select %p230, %s19, 1
      %p232 = scmp.lt.s32.totalorder %s20, 0
      %s233 = scalar_select %p232, %s20, 0
      %p234 = scmp.lt.s32.totalorder %s21, 0
      %s235 = scalar_select %p234, %s21, 0
      %s236 = sadd.s32 %s235, %s233
      %s237 = sadd.s32 %s236, %s231
      %s238 = smul.addr %s237, 4
      %s239 = scalar_lea.vmem %s2, %s238
      %p240 = scmp.eq.s32.totalorder %s22, 0
      // Predicated region
      $region29: #{siamese_forward.3} parent=27 // pred_check
        %p241 = pneg %p240
      $region30: #{siamese_forward.3} parent=27 // pred_check_branch
        %243 = sbr.rel (%p241) target = $region32
      $region31: #{siamese_forward.3} parent=27 // pred_region
        %244 = vst [vmem:[#allocation2] sm:$0xff] 0.0
      $region32: #{siamese_forward.3} parent=27 // pred_fallthru
        _
      %v245 = vld [vmem:[#allocation2] sm:$0xff]
      %v246 = vld [vmem:[%s218] sm:$0xff]
      %v247 = vld [vmem:[%s218 + $0x8] sm:$0xff]
      %v248 = vpack.c.bf16 %v246, %v246
      %v249 = vpack.c.bf16 %v247, %v247
      %v250 = vld [vmem:[%s228] sm:$0xf]
      %v251 = vld [vmem:[%s228 + $0x4] sm:$0xf]
      %v252 = vld [vmem:[%s228 + $0x8] sm:$0xf]
      %v253 = vld [vmem:[%s228 + $0xc] sm:$0xf]
      %v254 = vld [vmem:[%s228 + $0x10] sm:$0xf]
      %v255 = vld [vmem:[%s228 + $0x14] sm:$0xf]
      %v256 = vld [vmem:[%s228 + $0x18] sm:$0xf]
      %v257 = vld [vmem:[%s228 + $0x1c] sm:$0xf]
      %v258 = vld [vmem:[%s228 + $0x20] sm:$0xf]
      %v259 = vld [vmem:[%s228 + $0x24] sm:$0xf]
      %v260 = vld [vmem:[%s228 + $0x28] sm:$0xf]
      %v261 = vld [vmem:[%s228 + $0x2c] sm:$0xf]
      %v262 = vld [vmem:[%s228 + $0x30] sm:$0xf]
      %v263 = vld [vmem:[%s228 + $0x34] sm:$0xf]
      %v264 = vld [vmem:[%s228 + $0x38] sm:$0xf]
      %v265 = vld [vmem:[%s228 + $0x3c] sm:$0xf]
      %v266 = vld [vmem:[%s228 + $0x40] sm:$0xf]
      %v267 = vld [vmem:[%s228 + $0x44] sm:$0xf]
      %v268 = vld [vmem:[%s228 + $0x48] sm:$0xf]
      %v269 = vld [vmem:[%s228 + $0x4c] sm:$0xf]
      %v270 = vld [vmem:[%s228 + $0x50] sm:$0xf]
      %v271 = vld [vmem:[%s228 + $0x54] sm:$0xf]
      %v272 = vld [vmem:[%s228 + $0x58] sm:$0xf]
      %v273 = vld [vmem:[%s228 + $0x5c] sm:$0xf]
      %v274 = vld [vmem:[%s228 + $0x60] sm:$0xf]
      %v275 = vld [vmem:[%s228 + $0x64] sm:$0xf]
      %v276 = vld [vmem:[%s228 + $0x68] sm:$0xf]
      %v277 = vld [vmem:[%s228 + $0x6c] sm:$0xf]
      %v278 = vld [vmem:[%s228 + $0x70] sm:$0xf]
      %v279 = vld [vmem:[%s228 + $0x74] sm:$0xf]
      %v280 = vld [vmem:[%s228 + $0x78] sm:$0xf]
      %v281 = vld [vmem:[%s228 + $0x7c] sm:$0xf]
      %v314 = vunpack.c.l.b16 %v250
      %v315 = vunpack.c.l.b16 %v251
      %v316 = vunpack.c.l.b16 %v252
      %v317 = vunpack.c.l.b16 %v253
      %v318 = vunpack.c.l.b16 %v254
      %v319 = vunpack.c.l.b16 %v255
      %v320 = vunpack.c.l.b16 %v256
      %v321 = vunpack.c.l.b16 %v257
      %v322 = vunpack.c.l.b16 %v258
      %v323 = vunpack.c.l.b16 %v259
      %v324 = vunpack.c.l.b16 %v260
      %v325 = vunpack.c.l.b16 %v261
      %v326 = vunpack.c.l.b16 %v262
      %v327 = vunpack.c.l.b16 %v263
      %v328 = vunpack.c.l.b16 %v264
      %v329 = vunpack.c.l.b16 %v265
      %v330 = vunpack.c.l.b16 %v266
      %v331 = vunpack.c.l.b16 %v267
      %v332 = vunpack.c.l.b16 %v268
      %v333 = vunpack.c.l.b16 %v269
      %v334 = vunpack.c.l.b16 %v270
      %v335 = vunpack.c.l.b16 %v271
      %v336 = vunpack.c.l.b16 %v272
      %v337 = vunpack.c.l.b16 %v273
      %v338 = vunpack.c.l.b16 %v274
      %v339 = vunpack.c.l.b16 %v275
      %v340 = vunpack.c.l.b16 %v276
      %v341 = vunpack.c.l.b16 %v277
      %v342 = vunpack.c.l.b16 %v278
      %v343 = vunpack.c.l.b16 %v279
      %v344 = vunpack.c.l.b16 %v280
      %v345 = vunpack.c.l.b16 %v281
      %v346 = vpack.c.b16 %v315, %v314
      %v347 = vpack.c.b16 %v317, %v316
      %v348 = vpack.c.b16 %v319, %v318
      %v349 = vpack.c.b16 %v321, %v320
      %v350 = vpack.c.b16 %v323, %v322
      %v351 = vpack.c.b16 %v325, %v324
      %v352 = vpack.c.b16 %v327, %v326
      %v353 = vpack.c.b16 %v329, %v328
      %v354 = vpack.c.b16 %v331, %v330
      %v355 = vpack.c.b16 %v333, %v332
      %v356 = vpack.c.b16 %v335, %v334
      %v357 = vpack.c.b16 %v337, %v336
      %v358 = vpack.c.b16 %v339, %v338
      %v359 = vpack.c.b16 %v341, %v340
      %v360 = vpack.c.b16 %v343, %v342
      %v361 = vpack.c.b16 %v345, %v344
      %378 = vmatpush.bf16.msra.mxu0 %v353
      %379 = vmatpush.bf16.msra.mxu0 %v352
      %380 = vmatpush.bf16.msra.mxu0 %v351
      %381 = vmatpush.bf16.msra.mxu0 %v350
      %382 = vmatpush.bf16.msra.mxu0 %v349
      %383 = vmatpush.bf16.msra.mxu0 %v348
      %384 = vmatpush.bf16.msra.mxu0 %v347
      %385 = vmatpush.bf16.msra.mxu0 %v346
      %386 = vmatmul.bf16.gmra.mxu0 %v248
      %v387 = vpop.f32.mrf.mxu0
      %v388 = vadd.f32 0.0, %v387
      %v389 = vpop.f32.mrf.mxu0
      %390 = vdwg.mxu0
      %391 = vmatpush.bf16.msra.mxu0 %v361
      %392 = vmatpush.bf16.msra.mxu0 %v360
      %393 = vmatpush.bf16.msra.mxu0 %v359
      %394 = vmatpush.bf16.msra.mxu0 %v358
      %395 = vmatpush.bf16.msra.mxu0 %v357
      %396 = vmatpush.bf16.msra.mxu0 %v356
      %397 = vmatpush.bf16.msra.mxu0 %v355
      %398 = vmatpush.bf16.msra.mxu0 %v354
      %399 = vmatmul.bf16.gmra.mxu0 %v249
      %v400 = vpop.f32.mrf.mxu0
      %v401 = vadd.f32 %v388, %v400
      %v402 = vpop.f32.mrf.mxu0
      %403 = vdwg.mxu0
      %v404 = vadd.f32 %v245, %v401
      %405 = vst [vmem:[#allocation2] sm:$0xff] %v404
      // Predicated region
      $region33: #{siamese_forward.3} parent=27 // pred_check
        %p406 = pneg %p240
      $region34: #{siamese_forward.3} parent=27 // pred_check_branch
        %408 = sbr.rel (%p406) target = $region36
      $region35: #{siamese_forward.3} parent=27 // pred_region
        %v409 = vld [vmem:[#allocation2] sm:$0xff]
        %v410 = vmax.f32 %v409, 0.0
        %v411 = vpack.c.bf16 %v410, %v410
        %412 = vst [vmem:[%s239] sm:$0xf] %v411
      $region36: #{siamese_forward.3} parent=27 // pred_fallthru
        _
      %p413 = scmp.lt.s32.totalorder %s19, 1
      %s414 = scalar_select %p413, %s19, 1
      %p415 = scmp.lt.s32.totalorder %s20, 0
      %s416 = scalar_select %p415, %s20, 0
      %p417 = scmp.lt.s32.totalorder %s21, 0
      %s418 = scalar_select %p417, %s21, 0
      %s419 = sadd.s32 %s418, %s416
      %s420 = sadd.s32 %s419, %s414
      %s421 = smul.addr %s420, 4
      %s422 = scalar_lea.vmem %s2, %s421
      // Predicated region
      $region37: #{siamese_forward.3} parent=27 // pred_check
        %p423 = pneg %p119
      $region38: #{siamese_forward.3} parent=27 // pred_check_branch
        %425 = sbr.rel (%p423) target = $region40
      $region39: #{siamese_forward.3} parent=27 // pred_region
        _
      $region40: #{siamese_forward.3} parent=27 // pred_fallthru
        _
    $region28: #{siamese_forward.3} parent=5 // pred_fallthru
      _
    %p426 = scmp.le.s32.totalorder 2, %s8
    // Predicated region
    $region41: #{siamese_forward.3} parent=5 // pred_check
      %p427 = pneg %p426
    $region42: #{siamese_forward.3} parent=5 // pred_check_branch
      %429 = sbr.rel (%p427) target = $region44
    $region43: #{siamese_forward.3} parent=5 // pred_region
      %s430 = ssub.s32 %s8, 2
      // Predicated region
      $region45: #{siamese_forward.3} parent=43 // pred_check
        %p431 = pneg %p125
      $region46: #{siamese_forward.3} parent=43 // pred_check_branch
        %433 = sbr.rel (%p431) target = $region48
      $region47: #{siamese_forward.3} parent=43 // pred_region
        %p434 = scmp.lt.s32.totalorder %s23, 1
        %s435 = scalar_select %p434, %s23, 1
        %p436 = scmp.lt.s32.totalorder %s24, 0
        %s437 = scalar_select %p436, %s24, 0
        %p438 = scmp.lt.s32.totalorder %s25, 0
        %s439 = scalar_select %p438, %s25, 0
        %s440 = sadd.s32 %s439, %s437
        %s441 = sadd.s32 %s440, %s435
        %s442 = smul.addr %s441, 4
        %s443 = scalar_lea.vmem %s2, %s442
      $region48: #{siamese_forward.3} parent=43 // pred_fallthru
        _
    $region44: #{siamese_forward.3} parent=5 // pred_fallthru
      _
  $region6: #{siamese_forward.3} parent=0 // loop_footer
    %s12 = sadd.s32 1, %s8
  $region7: #{siamese_forward.3} parent=0 // loop_footer_branch
    %7 = sbr.rel target = $region3
  $region8: #{siamese_forward.3} parent=0 // loop_exit
    _

// kernel: siamese_forward.5
$region0: #{siamese_forward.5}
  #allocation0 [shape = 'u32[]', space=smem, size = 0x4, offset = 0x4, fixed_abs, tag = 'smem constant byte address 0x4 - core index']
  #allocation1 [shape = 'u32[72,128]{1,0:T(1,128)}', space=vmem, size = 0x9000, scoped, tag = 'internal scratch']
  %s0 = inlined_call_operand.vmem [shape: f32[2,8,128], index: 0, kind: input, shape index: {}]
  %s1 = inlined_call_operand.hbm [shape: bf16[128,128], index: 1, kind: input, shape index: {}]
  %s2 = inlined_call_operand.vmem [shape: f32[1,128], index: 2, kind: input, shape index: {}]
  %s3 = inlined_call_operand.vmem [shape: f32[1,128], index: 3, kind: input, shape index: {}]
  %s4 = inlined_call_operand.hbm [shape: bf16[128,128], index: 4, kind: input, shape index: {}]
  %s5 = inlined_call_operand.hbm [shape: f32[1,1], index: 5, kind: output, shape index: {}]
  %s6 = sld [smem:[#allocation0]]
  $region38: #{siamese_forward.5} parent=0
    _
  %s8 = ssub.s32 1, %s6
  %s9 = scalar_select 0, %s8, %s6
  $region1: #{siamese_forward.5} parent=0
    #allocation2 [shape = 'u8[32768]{0}', space=vmem, size = 0x8000, scoped, tag = 'input window, operand 1, single buffered']
    #allocation3 [shape = 's32[1]{0}', space=sflag, size = 0x4, scoped, tag = 'scoped memory for siamese_forward.5']
    #allocation4 [shape = 's32[1]{0}', space=sflag, size = 0x4, scoped, tag = 'scoped memory for siamese_forward.5']
    #allocation5 [shape = 'u8[32768]{0}', space=vmem, size = 0x8000, scoped, tag = 'input window, operand 4, single buffered']
    #allocation6 [shape = 's32[1]{0}', space=sflag, size = 0x4, scoped, tag = 'scoped memory for siamese_forward.5']
    #allocation7 [shape = 'u8[512]{0}', space=vmem, size = 0x400, scoped, tag = 'output window, operand 0, single buffered']
    %10 = vsyncpa [#allocation3], 0
    %11 = vsyncpa [#allocation6], 0
    %12 = vsyncpa [#allocation4], 0
    // Predicated region
    $region2: #{siamese_forward.5} parent=1 // pred_check
      _
    $region3: #{siamese_forward.5} parent=1 // pred_check_branch
      %14 = sbr.rel (0) target = $region5
    $region4: #{siamese_forward.5} parent=1 // pred_region
      _
    $region5: #{siamese_forward.5} parent=1 // pred_fallthru
      _
    // Predicated region
    $region6: #{siamese_forward.5} parent=1 // pred_check
      _
    $region7: #{siamese_forward.5} parent=1 // pred_check_branch
      %16 = sbr.rel (0) target = $region9
    $region8: #{siamese_forward.5} parent=1 // pred_region
      %18 = vsyncadd [#allocation3], 0
      %s19 = sshll.u32 %s1, 4
      %s20 = int_to_ptr.hbm [resolvable:$true] %s19
      %s21 = sshll.u32 [#allocation2], 4
      %s22 = int_to_ptr.vmem [resolvable:$true] %s21
      %27 = dma.hbm_to_vmem [thread:$0]  %s20, 1024, %s22, [#allocation3], 64, 64, 4
    $region9: #{siamese_forward.5} parent=1 // pred_fallthru
      _
    // Predicated region
    $region10: #{siamese_forward.5} parent=1 // pred_check
      _
    $region11: #{siamese_forward.5} parent=1 // pred_check_branch
      %29 = sbr.rel (0) target = $region13
    $region12: #{siamese_forward.5} parent=1 // pred_region
      _
    $region13: #{siamese_forward.5} parent=1 // pred_fallthru
      _
    // Predicated region
    $region14: #{siamese_forward.5} parent=1 // pred_check
      _
    $region15: #{siamese_forward.5} parent=1 // pred_check_branch
      %31 = sbr.rel (0) target = $region17
    $region16: #{siamese_forward.5} parent=1 // pred_region
      _
    $region17: #{siamese_forward.5} parent=1 // pred_fallthru
      _
    // Predicated region
    $region18: #{siamese_forward.5} parent=1 // pred_check
      _
    $region19: #{siamese_forward.5} parent=1 // pred_check_branch
      %33 = sbr.rel (0) target = $region21
    $region20: #{siamese_forward.5} parent=1 // pred_region
      %35 = vsyncadd [#allocation6], 0
      %s36 = sshll.u32 %s4, 4
      %s37 = int_to_ptr.hbm [resolvable:$true] %s36
      %s38 = sshll.u32 [#allocation5], 4
      %s39 = int_to_ptr.vmem [resolvable:$true] %s38
      %44 = dma.hbm_to_vmem [thread:$0]  %s37, 1024, %s39, [#allocation6], 64, 64, 4
    $region21: #{siamese_forward.5} parent=1 // pred_fallthru
      _
    // Predicated region
    $region22: #{siamese_forward.5} parent=1 // pred_check
      _
    $region23: #{siamese_forward.5} parent=1 // pred_check_branch
      %46 = sbr.rel (0) target = $region25
    $region24: #{siamese_forward.5} parent=1 // pred_region
      %48 = dma.done [#allocation3], 1024
    $region25: #{siamese_forward.5} parent=1 // pred_fallthru
      _
    // Predicated region
    $region26: #{siamese_forward.5} parent=1 // pred_check
      _
    $region27: #{siamese_forward.5} parent=1 // pred_check_branch
      %50 = sbr.rel (0) target = $region29
    $region28: #{siamese_forward.5} parent=1 // pred_region
      %52 = dma.done [#allocation6], 1024
    $region29: #{siamese_forward.5} parent=1 // pred_fallthru
      _
    %v53 = vld [vmem:[%s0] sm:$0xff]
    %s54 = scalar_lea.vmem %s0, 8
    %v55 = vld [vmem:[%s54] sm:$0xff]
    %v56 = vpack.c.bf16 %v53, %v53
    %v57 = vld [vmem:[#allocation2] sm:$0xf]
    %v58 = vld [vmem:[#allocation2 + $0x4] sm:$0xf]
    %v59 = vld [vmem:[#allocation2 + $0x8] sm:$0xf]
    %v60 = vld [vmem:[#allocation2 + $0xc] sm:$0xf]
    %v61 = vld [vmem:[#allocation2 + $0x10] sm:$0xf]
    %v62 = vld [vmem:[#allocation2 + $0x14] sm:$0xf]
    %v63 = vld [vmem:[#allocation2 + $0x18] sm:$0xf]
    %v64 = vld [vmem:[#allocation2 + $0x1c] sm:$0xf]
    %v65 = vld [vmem:[#allocation2 + $0x20] sm:$0xf]
    %v66 = vld [vmem:[#allocation2 + $0x24] sm:$0xf]
    %v67 = vld [vmem:[#allocation2 + $0x28] sm:$0xf]
    %v68 = vld [vmem:[#allocation2 + $0x2c] sm:$0xf]
    %v69 = vld [vmem:[#allocation2 + $0x30] sm:$0xf]
    %v70 = vld [vmem:[#allocation2 + $0x34] sm:$0xf]
    %v71 = vld [vmem:[#allocation2 + $0x38] sm:$0xf]
    %v72 = vld [vmem:[#allocation2 + $0x3c] sm:$0xf]
    %v89 = vunpack.c.l.b16 %v57
    %v90 = vunpack.c.l.b16 %v58
    %v91 = vunpack.c.l.b16 %v59
    %v92 = vunpack.c.l.b16 %v60
    %v93 = vunpack.c.l.b16 %v61
    %v94 = vunpack.c.l.b16 %v62
    %v95 = vunpack.c.l.b16 %v63
    %v96 = vunpack.c.l.b16 %v64
    %v97 = vunpack.c.l.b16 %v65
    %v98 = vunpack.c.l.b16 %v66
    %v99 = vunpack.c.l.b16 %v67
    %v100 = vunpack.c.l.b16 %v68
    %v101 = vunpack.c.l.b16 %v69
    %v102 = vunpack.c.l.b16 %v70
    %v103 = vunpack.c.l.b16 %v71
    %v104 = vunpack.c.l.b16 %v72
    %v105 = vpack.c.b16 %v90, %v89
    %v106 = vpack.c.b16 %v92, %v91
    %v107 = vpack.c.b16 %v94, %v93
    %v108 = vpack.c.b16 %v96, %v95
    %v109 = vpack.c.b16 %v98, %v97
    %v110 = vpack.c.b16 %v100, %v99
    %v111 = vpack.c.b16 %v102, %v101
    %v112 = vpack.c.b16 %v104, %v103
    %121 = vmatpush.bf16.msra.mxu0 %v112
    %122 = vmatpush.bf16.msra.mxu0 %v111
    %123 = vmatpush.bf16.msra.mxu0 %v110
    %124 = vmatpush.bf16.msra.mxu0 %v109
    %125 = vmatpush.bf16.msra.mxu0 %v108
    %126 = vmatpush.bf16.msra.mxu0 %v107
    %127 = vmatpush.bf16.msra.mxu0 %v106
    %128 = vmatpush.bf16.msra.mxu0 %v105
    %129 = vmatmul.bf16.gmra.mxu0 %v56
    %v130 = vpop.f32.mrf.mxu0
    %v131 = vadd.f32 0.0, %v130
    %v132 = vpop.f32.mrf.mxu0
    %133 = vdwg.mxu0
    %v134 = vld [vmem:[%s2] sm:$0x1]
    %v135 = vld [vmem:[%s3] sm:$0x1]
    %v136 = vrot.slane %v131, 4
    %v137 = vadd.f32 %v131, %v136
    %v138 = vrot.slane %v137, 2
    %v139 = vadd.f32 %v137, %v138
    %v140 = vrot.slane %v139, 1
    %v141 = vadd.f32 %v139, %v140
    %v142 = vrcp.pop 8.0
    %v143 = vmul.f32 8.0, %v142
    %v144 = vsub.f32 1.0, %v143
    %v145 = vmul.f32 %v142, %v144
    %v146 = vadd.f32 %v142, %v145
    %vm147 = vweird.f32 %v142
    %v148 = vsel %vm147, %v142, %v146
    %v149 = vmul.f32 %v141, %v148
    %v150 = vsub.f32 %v131, %v149
    %v151 = vmul.f32 %v150, %v150
    %v152 = vrot.slane %v151, 4
    %v153 = vadd.f32 %v151, %v152
    %v154 = vrot.slane %v153, 2
    %v155 = vadd.f32 %v153, %v154
    %v156 = vrot.slane %v155, 1
    %v157 = vadd.f32 %v155, %v156
    %v158 = vmul.f32 %v157, %v148
    %v159 = vadd.f32 %v158, 1e-05
    %v160 = vrsqrt.pop %v159
    %v161 = vmul.f32 %v160, %v159
    %v162 = vmul.f32 %v161, %v160
    %v163 = vmul.f32 0.5, %v162
    %v164 = vsub.f32 1.5, %v163
    %v165 = vmul.f32 %v160, %v164
    %vm166 = vweird.f32 %v159
    %vm167 = vweird.f32 %v160
    %vm168 = vmor %vm166, %vm167
    %v169 = vsel %vm168, %v160, %v165
    %v170 = vmul.f32 %v150, %v169
    %v172 = vperm.slane %v134, 0
    %v174 = vmul.f32 %v170, %v172
    %v176 = vperm.slane %v135, 0
    %v178 = vadd.f32 %v174, %v176
    %v179 = vmax.f32 %v178, 0.0
    %v180 = vpack.c.bf16 %v179, %v179
    %v181 = vld [vmem:[#allocation5] sm:$0xf]
    %v182 = vld [vmem:[#allocation5 + $0x4] sm:$0xf]
    %v183 = vld [vmem:[#allocation5 + $0x8] sm:$0xf]
    %v184 = vld [vmem:[#allocation5 + $0xc] sm:$0xf]
    %v185 = vld [vmem:[#allocation5 + $0x10] sm:$0xf]
    %v186 = vld [vmem:[#allocation5 + $0x14] sm:$0xf]
    %v187 = vld [vmem:[#allocation5 + $0x18] sm:$0xf]
    %v188 = vld [vmem:[#allocation5 + $0x1c] sm:$0xf]
    %v189 = vld [vmem:[#allocation5 + $0x20] sm:$0xf]
    %v190 = vld [vmem:[#allocation5 + $0x24] sm:$0xf]
    %v191 = vld [vmem:[#allocation5 + $0x28] sm:$0xf]
    %v192 = vld [vmem:[#allocation5 + $0x2c] sm:$0xf]
    %v193 = vld [vmem:[#allocation5 + $0x30] sm:$0xf]
    %v194 = vld [vmem:[#allocation5 + $0x34] sm:$0xf]
    %v195 = vld [vmem:[#allocation5 + $0x38] sm:$0xf]
    %v196 = vld [vmem:[#allocation5 + $0x3c] sm:$0xf]
    %v213 = vunpack.c.l.b16 %v181
    %v214 = vunpack.c.l.b16 %v182
    %v215 = vunpack.c.l.b16 %v183
    %v216 = vunpack.c.l.b16 %v184
    %v217 = vunpack.c.l.b16 %v185
    %v218 = vunpack.c.l.b16 %v186
    %v219 = vunpack.c.l.b16 %v187
    %v220 = vunpack.c.l.b16 %v188
    %v221 = vunpack.c.l.b16 %v189
    %v222 = vunpack.c.l.b16 %v190
    %v223 = vunpack.c.l.b16 %v191
    %v224 = vunpack.c.l.b16 %v192
    %v225 = vunpack.c.l.b16 %v193
    %v226 = vunpack.c.l.b16 %v194
    %v227 = vunpack.c.l.b16 %v195
    %v228 = vunpack.c.l.b16 %v196
    %v229 = vpack.c.b16 %v214, %v213
    %v230 = vpack.c.b16 %v216, %v215
    %v231 = vpack.c.b16 %v218, %v217
    %v232 = vpack.c.b16 %v220, %v219
    %v233 = vpack.c.b16 %v222, %v221
    %v234 = vpack.c.b16 %v224, %v223
    %v235 = vpack.c.b16 %v226, %v225
    %v236 = vpack.c.b16 %v228, %v227
    %245 = vmatpush.bf16.msra.mxu0 %v236
    %246 = vmatpush.bf16.msra.mxu0 %v235
    %247 = vmatpush.bf16.msra.mxu0 %v234
    %248 = vmatpush.bf16.msra.mxu0 %v233
    %249 = vmatpush.bf16.msra.mxu0 %v232
    %250 = vmatpush.bf16.msra.mxu0 %v231
    %251 = vmatpush.bf16.msra.mxu0 %v230
    %252 = vmatpush.bf16.msra.mxu0 %v229
    %253 = vmatmul.bf16.gmra.mxu0 %v180
    %v254 = vpop.f32.mrf.mxu0
    %v255 = vadd.f32 0.0, %v254
    %v256 = vpop.f32.mrf.mxu0
    %257 = vdwg.mxu0
    %v258 = vmul.f32 %v255, %v255
    %259 = vadd.xlane.f32.xlu0 %v258
    %v260 = vpop.xlane.xlu0 %259
    %v261 = vmax.f32 %v260, 1e-24
    %v262 = vrsqrt.pop %v261
    %v263 = vmul.f32 %v262, %v261
    %v264 = vmul.f32 %v263, %v262
    %v265 = vmul.f32 0.5, %v264
    %v266 = vsub.f32 1.5, %v265
    %v267 = vmul.f32 %v262, %v266
    %vm268 = vweird.f32 %v261
    %vm269 = vweird.f32 %v262
    %vm270 = vmor %vm268, %vm269
    %v271 = vsel %vm270, %v262, %v267
    %v272 = vmul.f32 %v255, %v271
    %v273 = vmul.f32 %v55, %v55
    %274 = vadd.xlane.f32.xlu0 %v273
    %v275 = vpop.xlane.xlu0 %274
    %v276 = vmax.f32 %v275, 1e-24
    %v277 = vrsqrt.pop %v276
    %v278 = vmul.f32 %v277, %v276
    %v279 = vmul.f32 %v278, %v277
    %v280 = vmul.f32 0.5, %v279
    %v281 = vsub.f32 1.5, %v280
    %v282 = vmul.f32 %v277, %v281
    %vm283 = vweird.f32 %v276
    %vm284 = vweird.f32 %v277
    %vm285 = vmor %vm283, %vm284
    %v286 = vsel %vm285, %v277, %v282
    %v287 = vmul.f32 %v55, %v286
    %288 = vmatpush.xpose.msra.mxu0 0.0
    %289 = vmatpush.xpose.msra.mxu0 0.0
    %290 = vmatpush.xpose.msra.mxu0 0.0
    %291 = vmatpush.xpose.msra.mxu0 0.0
    %292 = vmatpush.xpose.msra.mxu0 0.0
    %293 = vmatpush.xpose.msra.mxu0 0.0
    %294 = vmatpush.xpose.msra.mxu0 0.0
    %295 = vmatpush.xpose.msra.mxu0 0.0
    %296 = vmatpush.xpose.msra.mxu0 0.0
    %297 = vmatpush.xpose.msra.mxu0 0.0
    %298 = vmatpush.xpose.msra.mxu0 0.0
    %299 = vmatpush.xpose.msra.mxu0 0.0
    %300 = vmatpush.xpose.msra.mxu0 0.0
    %301 = vmatpush.xpose.msra.mxu0 0.0
    %302 = vmatpush.xpose.msra.mxu0 0.0
    %303 = vmatpush.xpose.msra.mxu0 %v287
    %304 = vmatmul.f32.gmra.mxu0 %v272
    %v305 = vpop.f32.mrf.mxu0
    %v306 = vadd.f32 0.0, %v305
    %307 = vdwg.mxu0
    %308 = vmatpush.xpose.msra.mxu0 0.0
    %309 = vmatpush.xpose.msra.mxu0 0.0
    %310 = vmatpush.xpose.msra.mxu0 0.0
    %311 = vmatpush.xpose.msra.mxu0 0.0
    %312 = vmatpush.xpose.msra.mxu0 0.0
    %313 = vmatpush.xpose.msra.mxu0 0.0
    %314 = vmatpush.xpose.msra.mxu0 0.0
    %315 = vmatpush.xpose.msra.mxu0 0.0
    %316 = vmatpush.xpose.msra.mxu0 0.0
    %317 = vmatpush.xpose.msra.mxu0 0.0
    %318 = vmatpush.xpose.msra.mxu0 0.0
    %319 = vmatpush.xpose.msra.mxu0 0.0
    %320 = vmatpush.xpose.msra.mxu0 0.0
    %321 = vmatpush.xpose.msra.mxu0 0.0
    %322 = vmatpush.xpose.msra.mxu0 0.0
    %323 = vmatpush.xpose.msra.mxu0 %v272
    %324 = vmatmul.f32.gmra.mxu0 %v287
    %v325 = vpop.f32.mrf.mxu0
    %v326 = vadd.f32 0.0, %v325
    %327 = vdwg.mxu0
    %v328 = vlaneseq
    %v329 = vshrl.u32 %v328, 7
    %v330 = vlaneseq
    %v331 = vand.u32 %v330, 127
    %vm332 = vcmp.eq.s32.totalorder %v329, %v331
    %v333 = vsel %vm332, %v306, 0.0
    %vm334 = vcmask 64512
    %v335 = vsel %vm334, %v333, 0.0
    %336 = vadd.xlane.f32.xlu0 %v335
    %v337 = vpop.xlane.xlu0 %336
    %v338 = vsel %vm334, %v306, -inf
    %339 = vmax.xlane.f32.xlu0 %v338
    %v340 = vpop.xlane.xlu0 %339
    %v341 = vsub.f32 %v306, %v340
    %v342 = vmul.f32 %v341, 1.442695
    %v343 = vpow.pop %v342
    %v344 = vsel %vm334, %v343, 0.0
    %345 = vadd.xlane.f32.xlu0 %v344
    %v346 = vpop.xlane.xlu0 %345
    %v347 = vlog2.pop %v346
    %v348 = vmul.f32 %v347, 0.6931472
    %v349 = vadd.f32 %v348, %v340
    %v350 = vsub.f32 %v349, %v337
    %vm351 = vcmask 7168
    %v352 = vsel %vm351, %v350, 0.0
    %353 = vadd.xlane.f32.xlu0 %v352
    %v354 = vpop.xlane.xlu0 %353
    %v355 = vrot.slane %v354, 4
    %v356 = vadd.f32 %v354, %v355
    %v357 = vrot.slane %v356, 2
    %v358 = vadd.f32 %v356, %v357
    %v359 = vrot.slane %v358, 1
    %v360 = vadd.f32 %v358, %v359
    %s361 = vtos %v360
    %v362 = vrcp.pop 8.0
    %v363 = vmul.f32 8.0, %v362
    %v364 = vsub.f32 1.0, %v363
    %v365 = vmul.f32 %v362, %v364
    %v366 = vadd.f32 %v362, %v365
    %vm367 = vweird.f32 %v362
    %v368 = vsel %vm367, %v362, %v366
    %s369 = vtos %v368
    %s370 = smul.f32 %s361, %s369
    %v371 = vsel %vm332, %v326, 0.0
    %v372 = vsel %vm334, %v371, 0.0
    %373 = vadd.xlane.f32.xlu0 %v372
    %v374 = vpop.xlane.xlu0 %373
    %v375 = vsel %vm334, %v326, -inf
    %376 = vmax.xlane.f32.xlu0 %v375
    %v377 = vpop.xlane.xlu0 %376
    %v378 = vsub.f32 %v326, %v377
    %v379 = vmul.f32 %v378, 1.442695
    %v380 = vpow.pop %v379
    %v381 = vsel %vm334, %v380, 0.0
    %382 = vadd.xlane.f32.xlu0 %v381
    %v383 = vpop.xlane.xlu0 %382
    %v384 = vlog2.pop %v383
    %v385 = vmul.f32 %v384, 0.6931472
    %v386 = vadd.f32 %v385, %v377
    %v387 = vsub.f32 %v386, %v374
    %v388 = vsel %vm351, %v387, 0.0
    %389 = vadd.xlane.f32.xlu0 %v388
    %v390 = vpop.xlane.xlu0 %389
    %v391 = vrot.slane %v390, 4
    %v392 = vadd.f32 %v390, %v391
    %v393 = vrot.slane %v392, 2
    %v394 = vadd.f32 %v392, %v393
    %v395 = vrot.slane %v394, 1
    %v396 = vadd.f32 %v394, %v395
    %s397 = vtos %v396
    %v398 = vrcp.pop 8.0
    %v399 = vmul.f32 8.0, %v398
    %v400 = vsub.f32 1.0, %v399
    %v401 = vmul.f32 %v398, %v400
    %v402 = vadd.f32 %v398, %v401
    %vm403 = vweird.f32 %v398
    %v404 = vsel %vm403, %v398, %v402
    %s405 = vtos %v404
    %s406 = smul.f32 %s397, %s405
    %s407 = sadd.f32 %s370, %s406
    %s408 = smul.f32 %s407, 2.0
    %v409 = vstv %s408
    %vm410 = vcmask 0
    %411 = vst.msk [vmem:[#allocation7] sm:$0x1] %vm410, %v409
    // Predicated region
    $region30: #{siamese_forward.5} parent=1 // pred_check
      _
    $region31: #{siamese_forward.5} parent=1 // pred_check_branch
      %413 = sbr.rel (0) target = $region33
    $region32: #{siamese_forward.5} parent=1 // pred_region
      %415 = vsyncadd [#allocation4], 0
      %s417 = sshll.u32 [#allocation7], 4
      %s418 = int_to_ptr.vmem [resolvable:$true] %s417
      %s419 = sshll.u32 %s5, 4
      %s420 = int_to_ptr.hbm [resolvable:$true] %s419
      %422 = dma.vmem_to_hbm [thread:$0]  %s418, 16, %s420, [#allocation4]
    $region33: #{siamese_forward.5} parent=1 // pred_fallthru
      _
    // Predicated region
    $region34: #{siamese_forward.5} parent=1 // pred_check
      _
    $region35: #{siamese_forward.5} parent=1 // pred_check_branch
      %424 = sbr.rel (0) target = $region37
    $region36: #{siamese_forward.5} parent=1 // pred_region
      %426 = dma.done [#allocation4], 16
    $region37: #{siamese_forward.5} parent=1 // pred_fallthru
      _
    %427 = vsyncpa [#allocation3], 1
    %428 = vsyncpa [#allocation6], 1
    %429 = vsyncpa [#allocation4], 1

// kernel: siamese_forward.4
$region0: #{siamese_forward.4}
  #allocation0 [shape = 'u32[]', space=smem, size = 0x4, offset = 0x4, fixed_abs, tag = 'smem constant byte address 0x4 - core index']
  #allocation1 [shape = 'u32[72,128]{1,0:T(1,128)}', space=vmem, size = 0x9000, scoped, tag = 'internal scratch']
  #allocation2 [shape = 'f32[8,128]{1,0:T(8,128)}', space=vmem, size = 0x1000, scoped, tag = 'scratch operand']
  %s0 = inlined_call_operand.vmem [shape: bf16[2,8,128], index: 0, kind: input, shape index: {}]
  %s1 = inlined_call_operand.vmem [shape: bf16[128,128], index: 1, kind: input, shape index: {}]
  %s2 = inlined_call_operand.vmem [shape: f32[1,128], index: 2, kind: input, shape index: {}]
  %s3 = inlined_call_operand.vmem [shape: f32[1,128], index: 3, kind: input, shape index: {}]
  %s4 = inlined_call_operand.vmem [shape: bf16[128,128], index: 4, kind: input, shape index: {}]
  %s5 = inlined_call_operand.vmem [shape: f32[2,8,128], index: 5, kind: output, shape index: {}]
  %s6 = sld [smem:[#allocation0]]
  $region61: #{siamese_forward.4} parent=0
    _
  %s8 = ssub.s32 1, %s6
  %s9 = scalar_select 0, %s8, %s6
  loop: start=0, step=1, limit=4
  $region2: #{siamese_forward.4} parent=0 // loop_pre_header
    _
  $region3: #{siamese_forward.4} parent=0 // loop_header
    %s11 = sphi 0, %s15
    %p12 = scmp.ge.s32.totalorder %s11, 4
    %s18 = sphi 0, %s30
    %s19 = sphi 0, %s26
    %s20 = sphi 0, %s18
    %s21 = sphi 0, %s19
    %s22 = sphi 0, %s20
    %s23 = sphi 0, %s21
    %s33 = sphi 0, %s35
    %s36 = sphi 0, %s33
    %s37 = sphi 0, %s36
    %s53 = sphi 0, %s37
    %s59 = sphi 0, %s61
    %s62 = sphi 0, %s59
    %s63 = sphi 0, %s62
    %s79 = sphi 0, %s63
    %s85 = sphi 0, %s87
    %s88 = sphi 0, %s85
    %s89 = sphi 0, %s88
    %s105 = sphi 0, %s89
    %s111 = sphi 0, %s113
    %s114 = sphi 0, %s111
    %s115 = sphi 0, %s114
    %s131 = sphi 0, %s115
    %s137 = sphi 0, %s139
    %s140 = sphi 0, %s137
    %s141 = sphi 0, %s140
    %s157 = sphi 0, %s141
    %s163 = sphi 0, %s165
    %s166 = sphi 0, %s163
    %s167 = sphi 0, %s166
    %s183 = sphi 0, %s167
  $region4: #{siamese_forward.4} parent=0 // loop_header_branch
    %14 = sbr.rel (%p12) target = $region8
  $region5: #{siamese_forward.4} parent=0 // loop_body
    %s16 = ssub.s32 %s11, 1
    %s17 = ssub.s32 %s11, 2
    %s24 = sadd.s32 1, %s19
    %p25 = scmp.ge.s32.totalorder %s24, 1
    %s26 = scalar_select %p25, 0, %s24
    %s27 = sadd.s32 1, %s18
    %s28 = scalar_select %p25, %s27, %s18
    %p29 = scmp.ge.s32.totalorder %s28, 2
    %s30 = scalar_select %p29, 0, %s28
    %s31 = ssub.s32 %s18, %s30
    %p32 = scmp.eq.s32.totalorder %s31, 0
    %s34 = sadd.s32 %s33, 1
    %s35 = scalar_select %p32, %s33, %s34
    %p38 = pneg %p32
    %p39 = scmp.eq.s32.totalorder %s11, 1
    %p40 = por %p38, %p39
    %p41 = scmp.ne.s32.totalorder %s33, %s36
    %p42 = scmp.eq.s32.totalorder %s11, 0
    %p43 = por %p41, %p42
    %p44 = scmp.ne.s32.totalorder %s33, %s36
    %p45 = scmp.eq.s32.totalorder %s16, 1
    %p46 = por %p44, %p45
    %p47 = scmp.ne.s32.totalorder %s36, %s37
    %p48 = scmp.eq.s32.totalorder %s16, 0
    %p49 = por %p47, %p48
    %p50 = scmp.ne.s32.totalorder %s36, %s37
    %p51 = scmp.eq.s32.totalorder %s17, 1
    %p52 = por %p50, %p51
    %p54 = scmp.ne.s32.totalorder %s37, %s53
    %p55 = scmp.eq.s32.totalorder %s17, 0
    %p56 = por %p54, %p55
    %s57 = ssub.s32 %s19, %s26
    %p58 = scmp.eq.s32.totalorder %s57, 0
    %s60 = sadd.s32 %s59, 1
    %s61 = scalar_select %p58, %s59, %s60
    %p64 = pneg %p58
    %p65 = scmp.eq.s32.totalorder %s11, 1
    %p66 = por %p64, %p65
    %p67 = scmp.ne.s32.totalorder %s59, %s62
    %p68 = scmp.eq.s32.totalorder %s11, 0
    %p69 = por %p67, %p68
    %p70 = scmp.ne.s32.totalorder %s59, %s62
    %p71 = scmp.eq.s32.totalorder %s16, 1
    %p72 = por %p70, %p71
    %p73 = scmp.ne.s32.totalorder %s62, %s63
    %p74 = scmp.eq.s32.totalorder %s16, 0
    %p75 = por %p73, %p74
    %p76 = scmp.ne.s32.totalorder %s62, %s63
    %p77 = scmp.eq.s32.totalorder %s17, 1
    %p78 = por %p76, %p77
    %p80 = scmp.ne.s32.totalorder %s63, %s79
    %p81 = scmp.eq.s32.totalorder %s17, 0
    %p82 = por %p80, %p81
    %s83 = ssub.s32 %s19, %s26
    %p84 = scmp.eq.s32.totalorder %s83, 0
    %s86 = sadd.s32 %s85, 1
    %s87 = scalar_select %p84, %s85, %s86
    %p90 = pneg %p84
    %p91 = scmp.eq.s32.totalorder %s11, 1
    %p92 = por %p90, %p91
    %p93 = scmp.ne.s32.totalorder %s85, %s88
    %p94 = scmp.eq.s32.totalorder %s11, 0
    %p95 = por %p93, %p94
    %p96 = scmp.ne.s32.totalorder %s85, %s88
    %p97 = scmp.eq.s32.totalorder %s16, 1
    %p98 = por %p96, %p97
    %p99 = scmp.ne.s32.totalorder %s88, %s89
    %p100 = scmp.eq.s32.totalorder %s16, 0
    %p101 = por %p99, %p100
    %p102 = scmp.ne.s32.totalorder %s88, %s89
    %p103 = scmp.eq.s32.totalorder %s17, 1
    %p104 = por %p102, %p103
    %p106 = scmp.ne.s32.totalorder %s89, %s105
    %p107 = scmp.eq.s32.totalorder %s17, 0
    %p108 = por %p106, %p107
    %s109 = ssub.s32 %s19, %s26
    %p110 = scmp.eq.s32.totalorder %s109, 0
    %s112 = sadd.s32 %s111, 1
    %s113 = scalar_select %p110, %s111, %s112
    %p116 = pneg %p110
    %p117 = scmp.eq.s32.totalorder %s11, 1
    %p118 = por %p116, %p117
    %p119 = scmp.ne.s32.totalorder %s111, %s114
    %p120 = scmp.eq.s32.totalorder %s11, 0
    %p121 = por %p119, %p120
    %p122 = scmp.ne.s32.totalorder %s111, %s114
    %p123 = scmp.eq.s32.totalorder %s16, 1
    %p124 = por %p122, %p123
    %p125 = scmp.ne.s32.totalorder %s114, %s115
    %p126 = scmp.eq.s32.totalorder %s16, 0
    %p127 = por %p125, %p126
    %p128 = scmp.ne.s32.totalorder %s114, %s115
    %p129 = scmp.eq.s32.totalorder %s17, 1
    %p130 = por %p128, %p129
    %p132 = scmp.ne.s32.totalorder %s115, %s131
    %p133 = scmp.eq.s32.totalorder %s17, 0
    %p134 = por %p132, %p133
    %s135 = ssub.s32 %s19, %s26
    %p136 = scmp.eq.s32.totalorder %s135, 0
    %s138 = sadd.s32 %s137, 1
    %s139 = scalar_select %p136, %s137, %s138
    %p142 = pneg %p136
    %p143 = scmp.eq.s32.totalorder %s11, 1
    %p144 = por %p142, %p143
    %p145 = scmp.ne.s32.totalorder %s137, %s140
    %p146 = scmp.eq.s32.totalorder %s11, 0
    %p147 = por %p145, %p146
    %p148 = scmp.ne.s32.totalorder %s137, %s140
    %p149 = scmp.eq.s32.totalorder %s16, 1
    %p150 = por %p148, %p149
    %p151 = scmp.ne.s32.totalorder %s140, %s141
    %p152 = scmp.eq.s32.totalorder %s16, 0
    %p153 = por %p151, %p152
    %p154 = scmp.ne.s32.totalorder %s140, %s141
    %p155 = scmp.eq.s32.totalorder %s17, 1
    %p156 = por %p154, %p155
    %p158 = scmp.ne.s32.totalorder %s141, %s157
    %p159 = scmp.eq.s32.totalorder %s17, 0
    %p160 = por %p158, %p159
    %s161 = ssub.s32 %s18, %s30
    %p162 = scmp.eq.s32.totalorder %s161, 0
    %s164 = sadd.s32 %s163, 1
    %s165 = scalar_select %p162, %s163, %s164
    %p168 = pneg %p162
    %p169 = scmp.eq.s32.totalorder %s11, 1
    %p170 = por %p168, %p169
    %p171 = scmp.ne.s32.totalorder %s163, %s166
    %p172 = scmp.eq.s32.totalorder %s11, 0
    %p173 = por %p171, %p172
    %p174 = scmp.ne.s32.totalorder %s163, %s166
    %p175 = scmp.eq.s32.totalorder %s16, 1
    %p176 = por %p174, %p175
    %p177 = scmp.ne.s32.totalorder %s166, %s167
    %p178 = scmp.eq.s32.totalorder %s16, 0
    %p179 = por %p177, %p178
    %p180 = scmp.ne.s32.totalorder %s166, %s167
    %p181 = scmp.eq.s32.totalorder %s17, 1
    %p182 = por %p180, %p181
    %p184 = scmp.ne.s32.totalorder %s167, %s183
    %p185 = scmp.eq.s32.totalorder %s17, 0
    %p186 = por %p184, %p185
    %p187 = scmp.le.s32.totalorder 1, %s11
    %p188 = scmp.lt.s32.totalorder %s11, 3
    %p189 = pnand %p187, %p188
    %p190 = pneg %p189
    // Predicated region
    $region9: #{siamese_forward.4} parent=5 // pred_check
      _
    $region10: #{siamese_forward.4} parent=5 // pred_check_branch
      %192 = sbr.rel (%p189) target = $region12
    $region11: #{siamese_forward.4} parent=5 // pred_region
      %s193 = ssub.s32 %s11, 1
      // Predicated region
      $region13: #{siamese_forward.4} parent=11 // pred_check
        %p194 = pneg %p75
      $region14: #{siamese_forward.4} parent=11 // pred_check_branch
        %196 = sbr.rel (%p194) target = $region16
      $region15: #{siamese_forward.4} parent=11 // pred_region
        %p197 = scmp.lt.s32.totalorder %s21, 0
        %s198 = scalar_select %p197, %s21, 0
        %s199 = smul.addr %s198, 4
        %s200 = scalar_lea.vmem %s1, %s199
      $region16: #{siamese_forward.4} parent=11 // pred_fallthru
        _
      // Predicated region
      $region17: #{siamese_forward.4} parent=11 // pred_check
        %p201 = pneg %p101
      $region18: #{siamese_forward.4} parent=11 // pred_check_branch
        %203 = sbr.rel (%p201) target = $region20
      $region19: #{siamese_forward.4} parent=11 // pred_region
        %p204 = scmp.lt.s32.totalorder %s21, 0
        %s205 = scalar_select %p204, %s21, 0
        %s206 = scalar_lea.vmem %s2, %s205
      $region20: #{siamese_forward.4} parent=11 // pred_fallthru
        _
      // Predicated region
      $region21: #{siamese_forward.4} parent=11 // pred_check
        %p207 = pneg %p127
      $region22: #{siamese_forward.4} parent=11 // pred_check_branch
        %209 = sbr.rel (%p207) target = $region24
      $region23: #{siamese_forward.4} parent=11 // pred_region
        %p210 = scmp.lt.s32.totalorder %s21, 0
        %s211 = scalar_select %p210, %s21, 0
        %s212 = scalar_lea.vmem %s3, %s211
      $region24: #{siamese_forward.4} parent=11 // pred_fallthru
        _
      // Predicated region
      $region25: #{siamese_forward.4} parent=11 // pred_check
        %p213 = pneg %p153
      $region26: #{siamese_forward.4} parent=11 // pred_check_branch
        %215 = sbr.rel (%p213) target = $region28
      $region27: #{siamese_forward.4} parent=11 // pred_region
        %s216 = smul.u32 16, %s21
        %p217 = scmp.lt.s32.totalorder %s216, 15
        %s218 = scalar_select %p217, %s216, 15
        %s219 = smul.addr %s218, 4
        %s220 = scalar_lea.vmem %s4, %s219
        %s221 = smul.u32 16, %s21
      $region28: #{siamese_forward.4} parent=11 // pred_fallthru
        _
    $region12: #{siamese_forward.4} parent=5 // pred_fallthru
      _
    %p222 = scmp.lt.s32.totalorder %s11, 2
    // Predicated region
    $region29: #{siamese_forward.4} parent=5 // pred_check
      %p223 = pneg %p222
    $region30: #{siamese_forward.4} parent=5 // pred_check_branch
      %225 = sbr.rel (%p223) target = $region32
    $region31: #{siamese_forward.4} parent=5 // pred_region
      // Predicated region
      $region33: #{siamese_forward.4} parent=31 // pred_check
        %p226 = pneg %p43
      $region34: #{siamese_forward.4} parent=31 // pred_check_branch
        %228 = sbr.rel (%p226) target = $region36
      $region35: #{siamese_forward.4} parent=31 // pred_region
        %p229 = scmp.lt.s32.totalorder %s18, 1
        %s230 = scalar_select %p229, %s18, 1
        %s231 = smul.addr %s230, 4
        %s232 = scalar_lea.vmem %s0, %s231
      $region36: #{siamese_forward.4} parent=31 // pred_fallthru
        _
    $region32: #{siamese_forward.4} parent=5 // pred_fallthru
      _
    %p233 = scmp.le.s32.totalorder 1, %s11
    %p234 = scmp.lt.s32.totalorder %s11, 3
    %p235 = pnand %p233, %p234
    %p236 = pneg %p235
    // Predicated region
    $region37: #{siamese_forward.4} parent=5 // pred_check
      _
    $region38: #{siamese_forward.4} parent=5 // pred_check_branch
      %238 = sbr.rel (%p235) target = $region40
    $region39: #{siamese_forward.4} parent=5 // pred_region
      %s239 = ssub.s32 %s11, 1
      %p240 = scmp.lt.s32.totalorder %s20, 1
      %s241 = scalar_select %p240, %s20, 1
      %s242 = smul.addr %s241, 4
      %s243 = scalar_lea.vmem %s0, %s242
      %p244 = pneg %p49
      %p245 = pneg %p46
      %p246 = scmp.lt.s32.totalorder %s21, 0
      %s247 = scalar_select %p246, %s21, 0
      %s248 = smul.addr %s247, 4
      %s249 = scalar_lea.vmem %s1, %s248
      %p250 = pneg %p75
      %p251 = pneg %p72
      %p252 = scmp.lt.s32.totalorder %s21, 0
      %s253 = scalar_select %p252, %s21, 0
      %s254 = scalar_lea.vmem %s2, %s253
      %p255 = pneg %p101
      %p256 = pneg %p98
      %p257 = scmp.lt.s32.totalorder %s21, 0
      %s258 = scalar_select %p257, %s21, 0
      %s259 = scalar_lea.vmem %s3, %s258
      %p260 = pneg %p127
      %p261 = pneg %p124
      %s262 = smul.u32 16, %s21
      %p263 = scmp.lt.s32.totalorder %s262, 15
      %s264 = scalar_select %p263, %s262, 15
      %s265 = smul.addr %s264, 4
      %s266 = scalar_lea.vmem %s4, %s265
      %p267 = pneg %p153
      %p268 = pneg %p150
      %p269 = pneg %p179
      %p270 = pneg %p176
      %p271 = scmp.lt.s32.totalorder %s20, 1
      %s272 = scalar_select %p271, %s20, 1
      %s273 = smul.addr %s272, 8
      %s274 = scalar_lea.vmem %s5, %s273
      %p275 = scmp.lt.s32.totalorder %s20, 1
      %s276 = scalar_select %p275, %s20, 1
      %s277 = smul.addr %s276, 4
      %s278 = scalar_lea.vmem %s0, %s277
      %p279 = scmp.lt.s32.totalorder %s21, 0
      %s280 = scalar_select %p279, %s21, 0
      %s281 = smul.addr %s280, 4
      %s282 = scalar_lea.vmem %s1, %s281
      %p283 = scmp.lt.s32.totalorder %s21, 0
      %s284 = scalar_select %p283, %s21, 0
      %s285 = scalar_lea.vmem %s2, %s284
      %p286 = scmp.lt.s32.totalorder %s21, 0
      %s287 = scalar_select %p286, %s21, 0
      %s288 = scalar_lea.vmem %s3, %s287
      %s289 = smul.u32 16, %s21
      %p290 = scmp.lt.s32.totalorder %s289, 15
      %s291 = scalar_select %p290, %s289, 15
      %s292 = smul.addr %s291, 4
      %s293 = scalar_lea.vmem %s4, %s292
      %s294 = smul.u32 16, %s21
      %p295 = scmp.lt.s32.totalorder %s20, 1
      %s296 = scalar_select %p295, %s20, 1
      %s297 = smul.addr %s296, 8
      %s298 = scalar_lea.vmem %s5, %s297
      %p299 = scmp.eq.s32.totalorder %s21, 0
      // Predicated region
      $region41: #{siamese_forward.4} parent=39 // pred_check
        %p300 = pneg %p299
      $region42: #{siamese_forward.4} parent=39 // pred_check_branch
        %302 = sbr.rel (%p300) target = $region44
      $region43: #{siamese_forward.4} parent=39 // pred_region
        %303 = vst [vmem:[#allocation2] sm:$0xff] 0.0
      $region44: #{siamese_forward.4} parent=39 // pred_fallthru
        _
      %v304 = vld [vmem:[%s278] sm:$0xf]
      %v305 = vld [vmem:[%s282] sm:$0xf]
      %v306 = vld [vmem:[%s282 + $0x4] sm:$0xf]
      %v307 = vld [vmem:[%s282 + $0x8] sm:$0xf]
      %v308 = vld [vmem:[%s282 + $0xc] sm:$0xf]
      %v309 = vld [vmem:[%s282 + $0x10] sm:$0xf]
      %v310 = vld [vmem:[%s282 + $0x14] sm:$0xf]
      %v311 = vld [vmem:[%s282 + $0x18] sm:$0xf]
      %v312 = vld [vmem:[%s282 + $0x1c] sm:$0xf]
      %v313 = vld [vmem:[%s282 + $0x20] sm:$0xf]
      %v314 = vld [vmem:[%s282 + $0x24] sm:$0xf]
      %v315 = vld [vmem:[%s282 + $0x28] sm:$0xf]
      %v316 = vld [vmem:[%s282 + $0x2c] sm:$0xf]
      %v317 = vld [vmem:[%s282 + $0x30] sm:$0xf]
      %v318 = vld [vmem:[%s282 + $0x34] sm:$0xf]
      %v319 = vld [vmem:[%s282 + $0x38] sm:$0xf]
      %v320 = vld [vmem:[%s282 + $0x3c] sm:$0xf]
      %v337 = vunpack.c.l.b16 %v305
      %v338 = vunpack.c.l.b16 %v306
      %v339 = vunpack.c.l.b16 %v307
      %v340 = vunpack.c.l.b16 %v308
      %v341 = vunpack.c.l.b16 %v309
      %v342 = vunpack.c.l.b16 %v310
      %v343 = vunpack.c.l.b16 %v311
      %v344 = vunpack.c.l.b16 %v312
      %v345 = vunpack.c.l.b16 %v313
      %v346 = vunpack.c.l.b16 %v314
      %v347 = vunpack.c.l.b16 %v315
      %v348 = vunpack.c.l.b16 %v316
      %v349 = vunpack.c.l.b16 %v317
      %v350 = vunpack.c.l.b16 %v318
      %v351 = vunpack.c.l.b16 %v319
      %v352 = vunpack.c.l.b16 %v320
      %v353 = vpack.c.b16 %v338, %v337
      %v354 = vpack.c.b16 %v340, %v339
      %v355 = vpack.c.b16 %v342, %v341
      %v356 = vpack.c.b16 %v344, %v343
      %v357 = vpack.c.b16 %v346, %v345
      %v358 = vpack.c.b16 %v348, %v347
      %v359 = vpack.c.b16 %v350, %v349
      %v360 = vpack.c.b16 %v352, %v351
      %369 = vmatpush.bf16.msra.mxu0 %v360
      %370 = vmatpush.bf16.msra.mxu0 %v359
      %371 = vmatpush.bf16.msra.mxu0 %v358
      %372 = vmatpush.bf16.msra.mxu0 %v357
      %373 = vmatpush.bf16.msra.mxu0 %v356
      %374 = vmatpush.bf16.msra.mxu0 %v355
      %375 = vmatpush.bf16.msra.mxu0 %v354
      %376 = vmatpush.bf16.msra.mxu0 %v353
      %377 = vmatmul.bf16.gmra.mxu0 %v304
      %v378 = vpop.f32.mrf.mxu0
      %v379 = vadd.f32 0.0, %v378
      %v380 = vpop.f32.mrf.mxu0
      %381 = vdwg.mxu0
      %v382 = vld [vmem:[%s285] sm:$0x1]
      %v383 = vld [vmem:[%s288] sm:$0x1]
      %v384 = vrot.slane %v379, 4
      %v385 = vadd.f32 %v379, %v384
      %v386 = vrot.slane %v385, 2
      %v387 = vadd.f32 %v385, %v386
      %v388 = vrot.slane %v387, 1
      %v389 = vadd.f32 %v387, %v388
      %v390 = vrcp.pop 8.0
      %v391 = vmul.f32 8.0, %v390
      %v392 = vsub.f32 1.0, %v391
      %v393 = vmul.f32 %v390, %v392
      %v394 = vadd.f32 %v390, %v393
      %vm395 = vweird.f32 %v390
      %v396 = vsel %vm395, %v390, %v394
      %v397 = vmul.f32 %v389, %v396
      %v398 = vsub.f32 %v379, %v397
      %v399 = vmul.f32 %v398, %v398
      %v400 = vrot.slane %v399, 4
      %v401 = vadd.f32 %v399, %v400
      %v402 = vrot.slane %v401, 2
      %v403 = vadd.f32 %v401, %v402
      %v404 = vrot.slane %v403, 1
      %v405 = vadd.f32 %v403, %v404
      %v406 = vmul.f32 %v405, %v396
      %v407 = vadd.f32 %v406, 1e-05
      %v408 = vrsqrt.pop %v407
      %v409 = vmul.f32 %v408, %v407
      %v410 = vmul.f32 %v409, %v408
      %v411 = vmul.f32 0.5, %v410
      %v412 = vsub.f32 1.5, %v411
      %v413 = vmul.f32 %v408, %v412
      %vm414 = vweird.f32 %v407
      %vm415 = vweird.f32 %v408
      %vm416 = vmor %vm414, %vm415
      %v417 = vsel %vm416, %v408, %v413
      %v418 = vmul.f32 %v398, %v417
      %v420 = vperm.slane %v382, 0
      %v422 = vmul.f32 %v418, %v420
      %v424 = vperm.slane %v383, 0
      %v426 = vadd.f32 %v422, %v424
      %v427 = vmax.f32 %v426, 0.0
      %v428 = vld [vmem:[#allocation2] sm:$0xff]
      %v429 = vpack.c.bf16 %v427, %v427
      %v430 = vld [vmem:[%s293] sm:$0xf]
      %v431 = vld [vmem:[%s293 + $0x4] sm:$0xf]
      %v432 = vld [vmem:[%s293 + $0x8] sm:$0xf]
      %v433 = vld [vmem:[%s293 + $0xc] sm:$0xf]
      %v434 = vld [vmem:[%s293 + $0x10] sm:$0xf]
      %v435 = vld [vmem:[%s293 + $0x14] sm:$0xf]
      %v436 = vld [vmem:[%s293 + $0x18] sm:$0xf]
      %v437 = vld [vmem:[%s293 + $0x1c] sm:$0xf]
      %v438 = vld [vmem:[%s293 + $0x20] sm:$0xf]
      %v439 = vld [vmem:[%s293 + $0x24] sm:$0xf]
      %v440 = vld [vmem:[%s293 + $0x28] sm:$0xf]
      %v441 = vld [vmem:[%s293 + $0x2c] sm:$0xf]
      %v442 = vld [vmem:[%s293 + $0x30] sm:$0xf]
      %v443 = vld [vmem:[%s293 + $0x34] sm:$0xf]
      %v444 = vld [vmem:[%s293 + $0x38] sm:$0xf]
      %v445 = vld [vmem:[%s293 + $0x3c] sm:$0xf]
      %v462 = vunpack.c.l.b16 %v430
      %v463 = vunpack.c.l.b16 %v431
      %v464 = vunpack.c.l.b16 %v432
      %v465 = vunpack.c.l.b16 %v433
      %v466 = vunpack.c.l.b16 %v434
      %v467 = vunpack.c.l.b16 %v435
      %v468 = vunpack.c.l.b16 %v436
      %v469 = vunpack.c.l.b16 %v437
      %v470 = vunpack.c.l.b16 %v438
      %v471 = vunpack.c.l.b16 %v439
      %v472 = vunpack.c.l.b16 %v440
      %v473 = vunpack.c.l.b16 %v441
      %v474 = vunpack.c.l.b16 %v442
      %v475 = vunpack.c.l.b16 %v443
      %v476 = vunpack.c.l.b16 %v444
      %v477 = vunpack.c.l.b16 %v445
      %v478 = vpack.c.b16 %v463, %v462
      %v479 = vpack.c.b16 %v465, %v464
      %v480 = vpack.c.b16 %v467, %v466
      %v481 = vpack.c.b16 %v469, %v468
      %v482 = vpack.c.b16 %v471, %v470
      %v483 = vpack.c.b16 %v473, %v472
      %v484 = vpack.c.b16 %v475, %v474
      %v485 = vpack.c.b16 %v477, %v476
      %494 = vmatpush.bf16.msra.mxu0 %v485
      %495 = vmatpush.bf16.msra.mxu0 %v484
      %496 = vmatpush.bf16.msra.mxu0 %v483
      %497 = vmatpush.bf16.msra.mxu0 %v482
      %498 = vmatpush.bf16.msra.mxu0 %v481
      %499 = vmatpush.bf16.msra.mxu0 %v480
      %500 = vmatpush.bf16.msra.mxu0 %v479
      %501 = vmatpush.bf16.msra.mxu0 %v478
      %502 = vmatmul.bf16.gmra.mxu0 %v429
      %v503 = vpop.f32.mrf.mxu0
      %v504 = vadd.f32 0.0, %v503
      %v505 = vpop.f32.mrf.mxu0
      %506 = vdwg.mxu0
      %v507 = vadd.f32 %v428, %v504
      %508 = vst [vmem:[#allocation2] sm:$0xff] %v507
      // Predicated region
      $region45: #{siamese_forward.4} parent=39 // pred_check
        %p509 = pneg %p299
      $region46: #{siamese_forward.4} parent=39 // pred_check_branch
        %511 = sbr.rel (%p509) target = $region48
      $region47: #{siamese_forward.4} parent=39 // pred_region
        %v512 = vld [vmem:[#allocation2] sm:$0xff]
        %v513 = vrot.slane %v512, 4
        %v514 = vadd.f32 %v512, %v513
        %v515 = vrot.slane %v514, 2
        %v516 = vadd.f32 %v514, %v515
        %v517 = vrot.slane %v516, 1
        %v518 = vadd.f32 %v516, %v517
        %v519 = vmul.f32 %v518, %v396
        %v520 = vsub.f32 %v512, %v519
        %v521 = vmul.f32 %v520, %v520
        %v522 = vrot.slane %v521, 4
        %v523 = vadd.f32 %v521, %v522
        %v524 = vrot.slane %v523, 2
        %v525 = vadd.f32 %v523, %v524
        %v526 = vrot.slane %v525, 1
        %v527 = vadd.f32 %v525, %v526
        %v528 = vmul.f32 %v527, %v396
        %v529 = vadd.f32 %v528, 1e-05
        %v530 = vrsqrt.pop %v529
        %v531 = vmul.f32 %v530, %v529
        %v532 = vmul.f32 %v531, %v530
        %v533 = vmul.f32 0.5, %v532
        %v534 = vsub.f32 1.5, %v533
        %v535 = vmul.f32 %v530, %v534
        %vm536 = vweird.f32 %v529
        %vm537 = vweird.f32 %v530
        %vm538 = vmor %vm536, %vm537
        %v539 = vsel %vm538, %v530, %v535
        %v540 = vmul.f32 %v520, %v539
        %541 = vst [vmem:[%s298] sm:$0xff] %v540
      $region48: #{siamese_forward.4} parent=39 // pred_fallthru
        _
      %p542 = scmp.lt.s32.totalorder %s20, 1
      %s543 = scalar_select %p542, %s20, 1
      %s544 = smul.addr %s543, 8
      %s545 = scalar_lea.vmem %s5, %s544
      // Predicated region
      $region49: #{siamese_forward.4} parent=39 // pred_check
        %p546 = pneg %p176
      $region50: #{siamese_forward.4} parent=39 // pred_check_branch
        %548 = sbr.rel (%p546) target = $region52
      $region51: #{siamese_forward.4} parent=39 // pred_region
        _
      $region52: #{siamese_forward.4} parent=39 // pred_fallthru
        _
    $region40: #{siamese_forward.4} parent=5 // pred_fallthru
      _
    %p549 = scmp.le.s32.totalorder 2, %s11
    // Predicated region
    $region53: #{siamese_forward.4} parent=5 // pred_check
      %p550 = pneg %p549
    $region54: #{siamese_forward.4} parent=5 // pred_check_branch
      %552 = sbr.rel (%p550) target = $region56
    $region55: #{siamese_forward.4} parent=5 // pred_region
      %s553 = ssub.s32 %s11, 2
      // Predicated region
      $region57: #{siamese_forward.4} parent=55 // pred_check
        %p554 = pneg %p182
      $region58: #{siamese_forward.4} parent=55 // pred_check_branch
        %556 = sbr.rel (%p554) target = $region60
      $region59: #{siamese_forward.4} parent=55 // pred_region
        %p557 = scmp.lt.s32.totalorder %s22, 1
        %s558 = scalar_select %p557, %s22, 1
        %s559 = smul.addr %s558, 8
        %s560 = scalar_lea.vmem %s5, %s559
      $region60: #{siamese_forward.4} parent=55 // pred_fallthru
        _
    $region56: #{siamese_forward.4} parent=5 // pred_fallthru
      _
  $region6: #{siamese_forward.4} parent=0 // loop_footer
    %s15 = sadd.s32 1, %s11
  $region7: #{siamese_forward.4} parent=0 // loop_footer_branch
    %10 = sbr.rel target = $region3
  $region8: #{siamese_forward.4} parent=0 // loop_exit
    _

</llo_original>
